<compile_context>
chip_gen: v7x
topology: tpu7x:2x2x1
jax: 0.10.0
libtpu: 0.0.40
codegen_flags: <defaults>
</compile_context>

<pallas_src>
import math

import jax
import jax.numpy as jnp
from jax.experimental import pallas as pl
from jax.experimental.pallas import tpu as pltpu

D_MODEL = 32
N_HEADS = 4
D_HEAD = D_MODEL // N_HEADS
D_FF = 4 * D_MODEL
EPS = 1e-5
NEG_INF = -1e9
SCALE = 1.0 / math.sqrt(D_HEAD)


def _pad8(n):
    return -(-n // 8) * 8


# Static, 8-aligned row offsets of each fused [W; b] section inside the weight slab.
_SEC = _pad8(D_MODEL + 1)                  # 40 rows per (D_MODEL, n)-weight section
OFF_QKV_S = 0 * _SEC                       # (D, 3D) fused Q|K|V self-attn proj
OFF_O_S   = 1 * _SEC                       # (D, D)  self-attn output proj
OFF_Q_C   = 2 * _SEC                       # (D, D)  cross-attn Q proj
OFF_KV_C  = 3 * _SEC                       # (D, 2D) fused cross K|V proj
OFF_O_C   = 4 * _SEC                       # (D, D)  cross-attn output proj
OFF_FF1   = 5 * _SEC                       # (D, D_FF) FFN expand
OFF_FF2   = 6 * _SEC                       # (D_FF, D) FFN contract
SLAB_ROWS = OFF_FF2 + _pad8(D_FF + 1)      # 240 + 136 = 376
SLAB_COLS = 128                            # widest section (D_FF) is already 128


def decoder_layer_kernel(xd_ref, xe_ref, bs_ref, bc_ref, ln_ref, w_ref, out_ref):
    xd = xd_ref[...]          # (B*Sd, D) f32 decoder rows (all batches flattened)
    xe = xe_ref[...]          # (B*Se, D) f32 encoder memory rows

    def layer_norm(x, g_row, b_row):
        mu = jnp.mean(x, axis=-1, keepdims=True)
        var = jnp.mean((x - mu) ** 2, axis=-1, keepdims=True)
        return ((x - mu) * jax.lax.rsqrt(var + EPS)
                * ln_ref[g_row:g_row + 1, :] + ln_ref[b_row:b_row + 1, :])

    def dense(x, off, k, n):
        # y = x @ W + b; W rows [off, off+k), bias row off+k of the bf16 slab.
        w = w_ref[off:off + k, :n]                       # static ref slice (view)
        b = w_ref[off + k:off + k + 1, :n]
        return (jnp.dot(x.astype(jnp.bfloat16), w,
                        preferred_element_type=jnp.float32)
                + b.astype(jnp.float32))

    def mha(q, k, v, bias, wo_off):
        # q:(Rq,D), k/v:(Rk,D) f32; bias:(Rq,Rk) already holds block-diagonal
        # batch mask + causal + key-padding. Output projection folded per head.
        qb = q.astype(jnp.bfloat16)
        kb = k.astype(jnp.bfloat16)
        vb = v.astype(jnp.bfloat16)
        acc = None
        for h in range(N_HEADS):                         # static unroll over heads
            sl = slice(h * D_HEAD, (h + 1) * D_HEAD)
            s = jnp.dot(qb[:, sl], kb[:, sl].T,
                        preferred_element_type=jnp.float32) * SCALE + bias
            s = s - jnp.max(s, axis=-1, keepdims=True)
            p = jnp.exp(s)
            pw = p * pl.reciprocal(jnp.sum(p, axis=-1, keepdims=True), approx=True)
            head = jnp.dot(pw.astype(jnp.bfloat16), vb[:, sl],
                           preferred_element_type=jnp.float32)
            contrib = jnp.dot(
                head.astype(jnp.bfloat16),
                w_ref[wo_off + h * D_HEAD:wo_off + (h + 1) * D_HEAD, :D_MODEL],
                preferred_element_type=jnp.float32)
            acc = contrib if acc is None else acc + contrib
        bo = w_ref[wo_off + D_MODEL:wo_off + D_MODEL + 1, :D_MODEL]
        return acc + bo.astype(jnp.float32)

    # ---- causal masked self-attention sublayer (pre-norm) ----
    xn = layer_norm(xd, 0, 1)
    qkv = dense(xn, OFF_QKV_S, D_MODEL, 3 * D_MODEL)     # fused Q|K|V projection
    x1 = xd + mha(qkv[:, :D_MODEL],
                  qkv[:, D_MODEL:2 * D_MODEL],
                  qkv[:, 2 * D_MODEL:],
                  bs_ref[...], OFF_O_S)                  # Sum() residual

    # ---- cross-attention sublayer (pre-norm on queries; K/V from encoder memory) ----
    x1n = layer_norm(x1, 2, 3)
    qc = dense(x1n, OFF_Q_C, D_MODEL, D_MODEL)
    kvc = dense(xe, OFF_KV_C, D_MODEL, 2 * D_MODEL)      # fused K|V projection
    x2 = x1 + mha(qc, kvc[:, :D_MODEL], kvc[:, D_MODEL:],
                  bc_ref[...], OFF_O_C)                  # Sum() residual

    # ---- position-wise FFN sublayer (pre-norm) ----
    x2n = layer_norm(x2, 4, 5)
    hh = jnp.maximum(dense(x2n, OFF_FF1, D_MODEL, D_FF), 0.0)
    x3 = x2 + dense(hh, OFF_FF2, D_FF, D_MODEL)          # Sum() residual

    out_ref[...] = x3


def _pack_weight_slab(params):
    """All [W; b] operands stacked into one zero-padded bf16 (SLAB_ROWS, 128) slab."""
    def wb(w, b):
        return jnp.concatenate([w, b.reshape(1, -1)], axis=0).astype(jnp.float32)

    sections = [
        (OFF_QKV_S, wb(jnp.concatenate([params['wq_s'], params['wk_s'], params['wv_s']], 1),
                       jnp.concatenate([params['bq_s'], params['bk_s'], params['bv_s']], 0))),
        (OFF_O_S,  wb(params['wo_s'], params['bo_s'])),
        (OFF_Q_C,  wb(params['wq_c'], params['bq_c'])),
        (OFF_KV_C, wb(jnp.concatenate([params['wk_c'], params['wv_c']], 1),
                      jnp.concatenate([params['bk_c'], params['bv_c']], 0))),
        (OFF_O_C,  wb(params['wo_c'], params['bo_c'])),
        (OFF_FF1,  wb(params['w1'], params['b1'])),
        (OFF_FF2,  wb(params['w2'], params['b2'])),
    ]
    slab = jnp.zeros((SLAB_ROWS, SLAB_COLS), jnp.float32)
    for off, mat in sections:
        r, c = mat.shape
        slab = slab.at[off:off + r, :c].set(mat)
    return slab.astype(jnp.bfloat16)


def decoder_layer(decoder_sequences, encoder_sequences,
                  src_key_padding_mask, tgt_key_padding_mask, params):
    """decoder_sequences: (B, Sd, D); encoder_sequences: (B, Se, D);
    masks: (B, S) bool, True = padded. Returns the 14-tuple of the PyTorch module."""
    B, Sd, D = decoder_sequences.shape
    _, Se, _ = encoder_sequences.shape
    assert D == D_MODEL

    xd = decoder_sequences.astype(jnp.float32).reshape(B * Sd, D)
    xe = encoder_sequences.astype(jnp.float32).reshape(B * Se, D)

    # Full additive attention biases, built wrapper-side:
    #   block-diagonal over batch (attention is per-sample) + causal + key-padding.
    bq = jnp.repeat(jnp.arange(B), Sd)
    bk_d = jnp.repeat(jnp.arange(B), Sd)
    bk_e = jnp.repeat(jnp.arange(B), Se)
    pos_q = jnp.tile(jnp.arange(Sd), B)
    pos_k = jnp.tile(jnp.arange(Sd), B)
    tgt_pad = tgt_key_padding_mask.reshape(B * Sd)
    src_pad = src_key_padding_mask.reshape(B * Se)

    allow_self = ((bq[:, None] == bk_d[None, :])
                  & (pos_k[None, :] <= pos_q[:, None])
                  & jnp.logical_not(tgt_pad)[None, :])
    allow_cross = ((bq[:, None] == bk_e[None, :])
                   & jnp.logical_not(src_pad)[None, :])
    bias_self = jnp.where(allow_self, 0.0, NEG_INF).astype(jnp.float32)   # (B*Sd, B*Sd)
    bias_cross = jnp.where(allow_cross, 0.0, NEG_INF).astype(jnp.float32)  # (B*Sd, B*Se)

    ln = jnp.stack([params['ln1_g'], params['ln1_b'],
                    params['ln2_g'], params['ln2_b'],
                    params['ln3_g'], params['ln3_b']], axis=0).astype(jnp.float32)
    wslab = _pack_weight_slab(params)

    vmem = pl.BlockSpec(memory_space=pltpu.MemorySpace.VMEM)
    out = pl.pallas_call(
        decoder_layer_kernel,
        out_shape=jax.ShapeDtypeStruct((B * Sd, D), jnp.float32),
        in_specs=[vmem] * 6,
        out_specs=vmem,
    )(xd, xe, bias_self, bias_cross, ln, wslab)

    out = out.reshape(B, Sd, D)

    # (decoder_sequences, s_q_mu, s_q_logvar, s_k_mu, s_k_logvar, s_v_mu, s_v_logvar,
    #  c_q_mu, c_q_logvar, c_k_mu, c_k_logvar, c_v_mu, c_v_logvar, gating_variances)
    return (out,) + (None,) * 13


def init_params(key, d_model=D_MODEL, d_ff=D_FF):
    ks = jax.random.split(key, 10)
    s = 1.0 / math.sqrt(d_model)
    ones = jnp.ones((d_model,), jnp.float32)
    z = lambda n: jnp.zeros((n,), jnp.float32)
    rnd = lambda k, shp, sc: jax.random.normal(k, shp, jnp.float32) * sc
    return {
        'ln1_g': ones, 'ln1_b': z(d_model),
        'ln2_g': ones, 'ln2_b': z(d_model),
        'ln3_g': ones, 'ln3_b': z(d_model),
        'wq_s': rnd(ks[0], (d_model, d_model), s), 'bq_s': z(d_model),
        'wk_s': rnd(ks[1], (d_model, d_model), s), 'bk_s': z(d_model),
        'wv_s': rnd(ks[2], (d_model, d_model), s), 'bv_s': z(d_model),
        'wo_s': rnd(ks[3], (d_model, d_model), s), 'bo_s': z(d_model),
        'wq_c': rnd(ks[4], (d_model, d_model), s), 'bq_c': z(d_model),
        'wk_c': rnd(ks[5], (d_model, d_model), s), 'bk_c': z(d_model),
        'wv_c': rnd(ks[6], (d_model, d_model), s), 'bv_c': z(d_model),
        'wo_c': rnd(ks[7], (d_model, d_model), s), 'bo_c': z(d_model),
        'w1': rnd(ks[8], (d_model, d_ff), s), 'b1': z(d_ff),
        'w2': rnd(ks[9], (d_ff, d_model), 1.0 / math.sqrt(d_ff)), 'b2': z(d_model),
    }


if __name__ == "__main__":
    B, SD, SE = 2, 8, 8
    key = jax.random.PRNGKey(0)
    kd, ke, kp = jax.random.split(key, 3)
    dec = jax.random.normal(kd, (B, SD, D_MODEL), jnp.float32)
    enc = jax.random.normal(ke, (B, SE, D_MODEL), jnp.float32)
    # True = padded: pad last 2 target positions of batch 1, last source position of batch 0.
    tgt_mask = jnp.zeros((B, SD), jnp.bool_).at[1, SD - 2:].set(True)
    src_mask = jnp.zeros((B, SE), jnp.bool_).at[0, SE - 1:].set(True)

    params = init_params(kp)
    out = decoder_layer(dec, enc, src_mask, tgt_mask, params)[0]
    jax.block_until_ready(out)
    assert out.shape == (B, SD, D_MODEL)
    assert bool(jnp.all(jnp.isfinite(out)))
    print("KERNEL_OK")
</pallas_src>

<mosaic_0001>
module attributes {stable_mosaic.version = 11 : i64} {
  func.func @decoder_layer_kernel(%arg0: memref<16x32xf32, #tpu.memory_space<vmem>>, %arg1: memref<16x32xf32, #tpu.memory_space<vmem>>, %arg2: memref<16x16xf32, #tpu.memory_space<vmem>>, %arg3: memref<16x16xf32, #tpu.memory_space<vmem>>, %arg4: memref<6x32xf32, #tpu.memory_space<vmem>>, %arg5: memref<376x128xbf16, #tpu.memory_space<vmem>>, %arg6: memref<16x32xf32, #tpu.memory_space<vmem>>) attributes {dimension_semantics = [], scalar_prefetch = 0 : i64, scratch_operands = 0 : i64, tpu.core_type = #tpu.core_type<tc>} {
    %c0 = arith.constant 0 : index
    %c0_0 = arith.constant 0 : index
    %0 = vector.load %arg0[%c0, %c0_0] : memref<16x32xf32, #tpu.memory_space<vmem>>, vector<16x32xf32>
    %c0_1 = arith.constant 0 : index
    %c0_2 = arith.constant 0 : index
    %1 = vector.load %arg1[%c0_1, %c0_2] : memref<16x32xf32, #tpu.memory_space<vmem>>, vector<16x32xf32>
    %cst = arith.constant dense<0.000000e+00> : vector<16xf32>
    %2 = vector.multi_reduction <add>, %0, %cst [1] : vector<16x32xf32> to vector<16xf32>
    %3 = vector.shape_cast %2 : vector<16xf32> to vector<16x1xf32>
    %cst_3 = arith.constant 3.200000e+01 : f32
    %4 = vector.broadcast %cst_3 : f32 to vector<16x1xf32>
    %5 = arith.divf %3, %4 : vector<16x1xf32>
    %6 = vector.broadcast %5 : vector<16x1xf32> to vector<16x32xf32>
    %7 = arith.subf %0, %6 : vector<16x32xf32>
    %8 = arith.mulf %7, %7 : vector<16x32xf32>
    %cst_4 = arith.constant dense<0.000000e+00> : vector<16xf32>
    %9 = vector.multi_reduction <add>, %8, %cst_4 [1] : vector<16x32xf32> to vector<16xf32>
    %10 = vector.shape_cast %9 : vector<16xf32> to vector<16x1xf32>
    %cst_5 = arith.constant 3.200000e+01 : f32
    %11 = vector.broadcast %cst_5 : f32 to vector<16x1xf32>
    %12 = arith.divf %10, %11 : vector<16x1xf32>
    %13 = vector.broadcast %5 : vector<16x1xf32> to vector<16x32xf32>
    %14 = arith.subf %0, %13 : vector<16x32xf32>
    %cst_6 = arith.constant 9.99999974E-6 : f32
    %15 = vector.broadcast %cst_6 : f32 to vector<16x1xf32>
    %16 = arith.addf %12, %15 : vector<16x1xf32>
    %17 = math.rsqrt %16 : vector<16x1xf32>
    %18 = vector.broadcast %17 : vector<16x1xf32> to vector<16x32xf32>
    %19 = arith.mulf %14, %18 : vector<16x32xf32>
    %c0_7 = arith.constant 0 : index
    %c0_8 = arith.constant 0 : index
    %20 = vector.load %arg4[%c0_7, %c0_8] : memref<6x32xf32, #tpu.memory_space<vmem>>, vector<1x32xf32>
    %21 = vector.broadcast %20 : vector<1x32xf32> to vector<16x32xf32>
    %22 = arith.mulf %19, %21 : vector<16x32xf32>
    %c1 = arith.constant 1 : index
    %c0_9 = arith.constant 0 : index
    %23 = vector.load %arg4[%c1, %c0_9] : memref<6x32xf32, #tpu.memory_space<vmem>>, vector<1x32xf32>
    %24 = vector.broadcast %23 : vector<1x32xf32> to vector<16x32xf32>
    %25 = arith.addf %22, %24 : vector<16x32xf32>
    %c0_10 = arith.constant 0 : index
    %c0_11 = arith.constant 0 : index
    %26 = vector.load %arg5[%c0_10, %c0_11] : memref<376x128xbf16, #tpu.memory_space<vmem>>, vector<32x96xbf16>
    %c32 = arith.constant 32 : index
    %c0_12 = arith.constant 0 : index
    %27 = vector.load %arg5[%c32, %c0_12] : memref<376x128xbf16, #tpu.memory_space<vmem>>, vector<1x96xbf16>
    %28 = arith.truncf %25 : vector<16x32xf32> to vector<16x32xbf16>
    %cst_13 = arith.constant dense<0.000000e+00> : vector<16x96xf32>
    %29 = tpu.matmul %28, %26, %cst_13 {dimension_numbers = #tpu.dot_dimension_numbers<[1], [0], [0], [1], [0, 0, 1, 1], [], []>} : vector<16x32xbf16>, vector<32x96xbf16>, vector<16x96xf32> -> vector<16x96xf32>
    %30 = arith.extf %27 : vector<1x96xbf16> to vector<1x96xf32>
    %31 = vector.broadcast %30 : vector<1x96xf32> to vector<16x96xf32>
    %32 = arith.addf %29, %31 : vector<16x96xf32>
    %33 = vector.extract_strided_slice %32 {offsets = [0, 0], sizes = [16, 32], strides = [1, 1]} : vector<16x96xf32> to vector<16x32xf32>
    %34 = vector.extract_strided_slice %32 {offsets = [0, 32], sizes = [16, 32], strides = [1, 1]} : vector<16x96xf32> to vector<16x32xf32>
    %35 = vector.extract_strided_slice %32 {offsets = [0, 64], sizes = [16, 32], strides = [1, 1]} : vector<16x96xf32> to vector<16x32xf32>
    %c0_14 = arith.constant 0 : index
    %c0_15 = arith.constant 0 : index
    %36 = vector.load %arg2[%c0_14, %c0_15] : memref<16x16xf32, #tpu.memory_space<vmem>>, vector<16x16xf32>
    %37 = arith.truncf %33 : vector<16x32xf32> to vector<16x32xbf16>
    %38 = arith.truncf %34 : vector<16x32xf32> to vector<16x32xbf16>
    %39 = arith.truncf %35 : vector<16x32xf32> to vector<16x32xbf16>
    %40 = vector.extract_strided_slice %37 {offsets = [0, 0], sizes = [16, 8], strides = [1, 1]} : vector<16x32xbf16> to vector<16x8xbf16>
    %41 = vector.extract_strided_slice %38 {offsets = [0, 0], sizes = [16, 8], strides = [1, 1]} : vector<16x32xbf16> to vector<16x8xbf16>
    %42 = tpu.transpose %41, [1, 0] : vector<16x8xbf16> -> vector<8x16xbf16>
    %cst_16 = arith.constant dense<0.000000e+00> : vector<16x16xf32>
    %43 = tpu.matmul %40, %42, %cst_16 {dimension_numbers = #tpu.dot_dimension_numbers<[1], [0], [0], [1], [0, 0, 1, 1], [], []>} : vector<16x8xbf16>, vector<8x16xbf16>, vector<16x16xf32> -> vector<16x16xf32>
    %cst_17 = arith.constant 0.353553385 : f32
    %44 = vector.broadcast %cst_17 : f32 to vector<16x16xf32>
    %45 = arith.mulf %43, %44 : vector<16x16xf32>
    %46 = arith.addf %45, %36 : vector<16x16xf32>
    %cst_18 = arith.constant dense<0xFF800000> : vector<16xf32>
    %47 = vector.multi_reduction <maximumf>, %46, %cst_18 [1] : vector<16x16xf32> to vector<16xf32>
    %48 = vector.shape_cast %47 : vector<16xf32> to vector<16x1xf32>
    %49 = vector.broadcast %48 : vector<16x1xf32> to vector<16x16xf32>
    %50 = arith.subf %46, %49 : vector<16x16xf32>
    %51 = math.exp %50 : vector<16x16xf32>
    %cst_19 = arith.constant dense<0.000000e+00> : vector<16xf32>
    %52 = vector.multi_reduction <add>, %51, %cst_19 [1] : vector<16x16xf32> to vector<16xf32>
    %53 = vector.shape_cast %52 : vector<16xf32> to vector<16x1xf32>
    %54 = tpu.reciprocal %53 {approx = true} : vector<16x1xf32> -> vector<16x1xf32>
    %55 = vector.broadcast %54 : vector<16x1xf32> to vector<16x16xf32>
    %56 = arith.mulf %51, %55 : vector<16x16xf32>
    %57 = arith.truncf %56 : vector<16x16xf32> to vector<16x16xbf16>
    %58 = vector.extract_strided_slice %39 {offsets = [0, 0], sizes = [16, 8], strides = [1, 1]} : vector<16x32xbf16> to vector<16x8xbf16>
    %cst_20 = arith.constant dense<0.000000e+00> : vector<16x8xf32>
    %59 = tpu.matmul %57, %58, %cst_20 {dimension_numbers = #tpu.dot_dimension_numbers<[1], [0], [0], [1], [0, 0, 1, 1], [], []>} : vector<16x16xbf16>, vector<16x8xbf16>, vector<16x8xf32> -> vector<16x8xf32>
    %60 = arith.truncf %59 : vector<16x8xf32> to vector<16x8xbf16>
    %c40 = arith.constant 40 : index
    %c0_21 = arith.constant 0 : index
    %61 = vector.load %arg5[%c40, %c0_21] : memref<376x128xbf16, #tpu.memory_space<vmem>>, vector<8x32xbf16>
    %cst_22 = arith.constant dense<0.000000e+00> : vector<16x32xf32>
    %62 = tpu.matmul %60, %61, %cst_22 {dimension_numbers = #tpu.dot_dimension_numbers<[1], [0], [0], [1], [0, 0, 1, 1], [], []>} : vector<16x8xbf16>, vector<8x32xbf16>, vector<16x32xf32> -> vector<16x32xf32>
    %63 = vector.extract_strided_slice %37 {offsets = [0, 8], sizes = [16, 8], strides = [1, 1]} : vector<16x32xbf16> to vector<16x8xbf16>
    %64 = vector.extract_strided_slice %38 {offsets = [0, 8], sizes = [16, 8], strides = [1, 1]} : vector<16x32xbf16> to vector<16x8xbf16>
    %65 = tpu.transpose %64, [1, 0] : vector<16x8xbf16> -> vector<8x16xbf16>
    %cst_23 = arith.constant dense<0.000000e+00> : vector<16x16xf32>
    %66 = tpu.matmul %63, %65, %cst_23 {dimension_numbers = #tpu.dot_dimension_numbers<[1], [0], [0], [1], [0, 0, 1, 1], [], []>} : vector<16x8xbf16>, vector<8x16xbf16>, vector<16x16xf32> -> vector<16x16xf32>
    %cst_24 = arith.constant 0.353553385 : f32
    %67 = vector.broadcast %cst_24 : f32 to vector<16x16xf32>
    %68 = arith.mulf %66, %67 : vector<16x16xf32>
    %69 = arith.addf %68, %36 : vector<16x16xf32>
    %cst_25 = arith.constant dense<0xFF800000> : vector<16xf32>
    %70 = vector.multi_reduction <maximumf>, %69, %cst_25 [1] : vector<16x16xf32> to vector<16xf32>
    %71 = vector.shape_cast %70 : vector<16xf32> to vector<16x1xf32>
    %72 = vector.broadcast %71 : vector<16x1xf32> to vector<16x16xf32>
    %73 = arith.subf %69, %72 : vector<16x16xf32>
    %74 = math.exp %73 : vector<16x16xf32>
    %cst_26 = arith.constant dense<0.000000e+00> : vector<16xf32>
    %75 = vector.multi_reduction <add>, %74, %cst_26 [1] : vector<16x16xf32> to vector<16xf32>
    %76 = vector.shape_cast %75 : vector<16xf32> to vector<16x1xf32>
    %77 = tpu.reciprocal %76 {approx = true} : vector<16x1xf32> -> vector<16x1xf32>
    %78 = vector.broadcast %77 : vector<16x1xf32> to vector<16x16xf32>
    %79 = arith.mulf %74, %78 : vector<16x16xf32>
    %80 = arith.truncf %79 : vector<16x16xf32> to vector<16x16xbf16>
    %81 = vector.extract_strided_slice %39 {offsets = [0, 8], sizes = [16, 8], strides = [1, 1]} : vector<16x32xbf16> to vector<16x8xbf16>
    %cst_27 = arith.constant dense<0.000000e+00> : vector<16x8xf32>
    %82 = tpu.matmul %80, %81, %cst_27 {dimension_numbers = #tpu.dot_dimension_numbers<[1], [0], [0], [1], [0, 0, 1, 1], [], []>} : vector<16x16xbf16>, vector<16x8xbf16>, vector<16x8xf32> -> vector<16x8xf32>
    %83 = arith.truncf %82 : vector<16x8xf32> to vector<16x8xbf16>
    %c48 = arith.constant 48 : index
    %c0_28 = arith.constant 0 : index
    %84 = vector.load %arg5[%c48, %c0_28] : memref<376x128xbf16, #tpu.memory_space<vmem>>, vector<8x32xbf16>
    %cst_29 = arith.constant dense<0.000000e+00> : vector<16x32xf32>
    %85 = tpu.matmul %83, %84, %cst_29 {dimension_numbers = #tpu.dot_dimension_numbers<[1], [0], [0], [1], [0, 0, 1, 1], [], []>} : vector<16x8xbf16>, vector<8x32xbf16>, vector<16x32xf32> -> vector<16x32xf32>
    %86 = arith.addf %62, %85 : vector<16x32xf32>
    %87 = vector.extract_strided_slice %37 {offsets = [0, 16], sizes = [16, 8], strides = [1, 1]} : vector<16x32xbf16> to vector<16x8xbf16>
    %88 = vector.extract_strided_slice %38 {offsets = [0, 16], sizes = [16, 8], strides = [1, 1]} : vector<16x32xbf16> to vector<16x8xbf16>
    %89 = tpu.transpose %88, [1, 0] : vector<16x8xbf16> -> vector<8x16xbf16>
    %cst_30 = arith.constant dense<0.000000e+00> : vector<16x16xf32>
    %90 = tpu.matmul %87, %89, %cst_30 {dimension_numbers = #tpu.dot_dimension_numbers<[1], [0], [0], [1], [0, 0, 1, 1], [], []>} : vector<16x8xbf16>, vector<8x16xbf16>, vector<16x16xf32> -> vector<16x16xf32>
    %cst_31 = arith.constant 0.353553385 : f32
    %91 = vector.broadcast %cst_31 : f32 to vector<16x16xf32>
    %92 = arith.mulf %90, %91 : vector<16x16xf32>
    %93 = arith.addf %92, %36 : vector<16x16xf32>
    %cst_32 = arith.constant dense<0xFF800000> : vector<16xf32>
    %94 = vector.multi_reduction <maximumf>, %93, %cst_32 [1] : vector<16x16xf32> to vector<16xf32>
    %95 = vector.shape_cast %94 : vector<16xf32> to vector<16x1xf32>
    %96 = vector.broadcast %95 : vector<16x1xf32> to vector<16x16xf32>
    %97 = arith.subf %93, %96 : vector<16x16xf32>
    %98 = math.exp %97 : vector<16x16xf32>
    %cst_33 = arith.constant dense<0.000000e+00> : vector<16xf32>
    %99 = vector.multi_reduction <add>, %98, %cst_33 [1] : vector<16x16xf32> to vector<16xf32>
    %100 = vector.shape_cast %99 : vector<16xf32> to vector<16x1xf32>
    %101 = tpu.reciprocal %100 {approx = true} : vector<16x1xf32> -> vector<16x1xf32>
    %102 = vector.broadcast %101 : vector<16x1xf32> to vector<16x16xf32>
    %103 = arith.mulf %98, %102 : vector<16x16xf32>
    %104 = arith.truncf %103 : vector<16x16xf32> to vector<16x16xbf16>
    %105 = vector.extract_strided_slice %39 {offsets = [0, 16], sizes = [16, 8], strides = [1, 1]} : vector<16x32xbf16> to vector<16x8xbf16>
    %cst_34 = arith.constant dense<0.000000e+00> : vector<16x8xf32>
    %106 = tpu.matmul %104, %105, %cst_34 {dimension_numbers = #tpu.dot_dimension_numbers<[1], [0], [0], [1], [0, 0, 1, 1], [], []>} : vector<16x16xbf16>, vector<16x8xbf16>, vector<16x8xf32> -> vector<16x8xf32>
    %107 = arith.truncf %106 : vector<16x8xf32> to vector<16x8xbf16>
    %c56 = arith.constant 56 : index
    %c0_35 = arith.constant 0 : index
    %108 = vector.load %arg5[%c56, %c0_35] : memref<376x128xbf16, #tpu.memory_space<vmem>>, vector<8x32xbf16>
    %cst_36 = arith.constant dense<0.000000e+00> : vector<16x32xf32>
    %109 = tpu.matmul %107, %108, %cst_36 {dimension_numbers = #tpu.dot_dimension_numbers<[1], [0], [0], [1], [0, 0, 1, 1], [], []>} : vector<16x8xbf16>, vector<8x32xbf16>, vector<16x32xf32> -> vector<16x32xf32>
    %110 = arith.addf %86, %109 : vector<16x32xf32>
    %111 = vector.extract_strided_slice %37 {offsets = [0, 24], sizes = [16, 8], strides = [1, 1]} : vector<16x32xbf16> to vector<16x8xbf16>
    %112 = vector.extract_strided_slice %38 {offsets = [0, 24], sizes = [16, 8], strides = [1, 1]} : vector<16x32xbf16> to vector<16x8xbf16>
    %113 = tpu.transpose %112, [1, 0] : vector<16x8xbf16> -> vector<8x16xbf16>
    %cst_37 = arith.constant dense<0.000000e+00> : vector<16x16xf32>
    %114 = tpu.matmul %111, %113, %cst_37 {dimension_numbers = #tpu.dot_dimension_numbers<[1], [0], [0], [1], [0, 0, 1, 1], [], []>} : vector<16x8xbf16>, vector<8x16xbf16>, vector<16x16xf32> -> vector<16x16xf32>
    %cst_38 = arith.constant 0.353553385 : f32
    %115 = vector.broadcast %cst_38 : f32 to vector<16x16xf32>
    %116 = arith.mulf %114, %115 : vector<16x16xf32>
    %117 = arith.addf %116, %36 : vector<16x16xf32>
    %cst_39 = arith.constant dense<0xFF800000> : vector<16xf32>
    %118 = vector.multi_reduction <maximumf>, %117, %cst_39 [1] : vector<16x16xf32> to vector<16xf32>
    %119 = vector.shape_cast %118 : vector<16xf32> to vector<16x1xf32>
    %120 = vector.broadcast %119 : vector<16x1xf32> to vector<16x16xf32>
    %121 = arith.subf %117, %120 : vector<16x16xf32>
    %122 = math.exp %121 : vector<16x16xf32>
    %cst_40 = arith.constant dense<0.000000e+00> : vector<16xf32>
    %123 = vector.multi_reduction <add>, %122, %cst_40 [1] : vector<16x16xf32> to vector<16xf32>
    %124 = vector.shape_cast %123 : vector<16xf32> to vector<16x1xf32>
    %125 = tpu.reciprocal %124 {approx = true} : vector<16x1xf32> -> vector<16x1xf32>
    %126 = vector.broadcast %125 : vector<16x1xf32> to vector<16x16xf32>
    %127 = arith.mulf %122, %126 : vector<16x16xf32>
    %128 = arith.truncf %127 : vector<16x16xf32> to vector<16x16xbf16>
    %129 = vector.extract_strided_slice %39 {offsets = [0, 24], sizes = [16, 8], strides = [1, 1]} : vector<16x32xbf16> to vector<16x8xbf16>
    %cst_41 = arith.constant dense<0.000000e+00> : vector<16x8xf32>
    %130 = tpu.matmul %128, %129, %cst_41 {dimension_numbers = #tpu.dot_dimension_numbers<[1], [0], [0], [1], [0, 0, 1, 1], [], []>} : vector<16x16xbf16>, vector<16x8xbf16>, vector<16x8xf32> -> vector<16x8xf32>
    %131 = arith.truncf %130 : vector<16x8xf32> to vector<16x8xbf16>
    %c64 = arith.constant 64 : index
    %c0_42 = arith.constant 0 : index
    %132 = vector.load %arg5[%c64, %c0_42] : memref<376x128xbf16, #tpu.memory_space<vmem>>, vector<8x32xbf16>
    %cst_43 = arith.constant dense<0.000000e+00> : vector<16x32xf32>
    %133 = tpu.matmul %131, %132, %cst_43 {dimension_numbers = #tpu.dot_dimension_numbers<[1], [0], [0], [1], [0, 0, 1, 1], [], []>} : vector<16x8xbf16>, vector<8x32xbf16>, vector<16x32xf32> -> vector<16x32xf32>
    %134 = arith.addf %110, %133 : vector<16x32xf32>
    %c72 = arith.constant 72 : index
    %c0_44 = arith.constant 0 : index
    %135 = vector.load %arg5[%c72, %c0_44] : memref<376x128xbf16, #tpu.memory_space<vmem>>, vector<1x32xbf16>
    %136 = arith.extf %135 : vector<1x32xbf16> to vector<1x32xf32>
    %137 = vector.broadcast %136 : vector<1x32xf32> to vector<16x32xf32>
    %138 = arith.addf %134, %137 : vector<16x32xf32>
    %139 = arith.addf %0, %138 : vector<16x32xf32>
    %cst_45 = arith.constant dense<0.000000e+00> : vector<16xf32>
    %140 = vector.multi_reduction <add>, %139, %cst_45 [1] : vector<16x32xf32> to vector<16xf32>
    %141 = vector.shape_cast %140 : vector<16xf32> to vector<16x1xf32>
    %cst_46 = arith.constant 3.200000e+01 : f32
    %142 = vector.broadcast %cst_46 : f32 to vector<16x1xf32>
    %143 = arith.divf %141, %142 : vector<16x1xf32>
    %144 = vector.broadcast %143 : vector<16x1xf32> to vector<16x32xf32>
    %145 = arith.subf %139, %144 : vector<16x32xf32>
    %146 = arith.mulf %145, %145 : vector<16x32xf32>
    %cst_47 = arith.constant dense<0.000000e+00> : vector<16xf32>
    %147 = vector.multi_reduction <add>, %146, %cst_47 [1] : vector<16x32xf32> to vector<16xf32>
    %148 = vector.shape_cast %147 : vector<16xf32> to vector<16x1xf32>
    %cst_48 = arith.constant 3.200000e+01 : f32
    %149 = vector.broadcast %cst_48 : f32 to vector<16x1xf32>
    %150 = arith.divf %148, %149 : vector<16x1xf32>
    %151 = vector.broadcast %143 : vector<16x1xf32> to vector<16x32xf32>
    %152 = arith.subf %139, %151 : vector<16x32xf32>
    %cst_49 = arith.constant 9.99999974E-6 : f32
    %153 = vector.broadcast %cst_49 : f32 to vector<16x1xf32>
    %154 = arith.addf %150, %153 : vector<16x1xf32>
    %155 = math.rsqrt %154 : vector<16x1xf32>
    %156 = vector.broadcast %155 : vector<16x1xf32> to vector<16x32xf32>
    %157 = arith.mulf %152, %156 : vector<16x32xf32>
    %c2 = arith.constant 2 : index
    %c0_50 = arith.constant 0 : index
    %158 = vector.load %arg4[%c2, %c0_50] : memref<6x32xf32, #tpu.memory_space<vmem>>, vector<1x32xf32>
    %159 = vector.broadcast %158 : vector<1x32xf32> to vector<16x32xf32>
    %160 = arith.mulf %157, %159 : vector<16x32xf32>
    %c3 = arith.constant 3 : index
    %c0_51 = arith.constant 0 : index
    %161 = vector.load %arg4[%c3, %c0_51] : memref<6x32xf32, #tpu.memory_space<vmem>>, vector<1x32xf32>
    %162 = vector.broadcast %161 : vector<1x32xf32> to vector<16x32xf32>
    %163 = arith.addf %160, %162 : vector<16x32xf32>
    %c80 = arith.constant 80 : index
    %c0_52 = arith.constant 0 : index
    %164 = vector.load %arg5[%c80, %c0_52] : memref<376x128xbf16, #tpu.memory_space<vmem>>, vector<32x32xbf16>
    %c112 = arith.constant 112 : index
    %c0_53 = arith.constant 0 : index
    %165 = vector.load %arg5[%c112, %c0_53] : memref<376x128xbf16, #tpu.memory_space<vmem>>, vector<1x32xbf16>
    %166 = arith.truncf %163 : vector<16x32xf32> to vector<16x32xbf16>
    %cst_54 = arith.constant dense<0.000000e+00> : vector<16x32xf32>
    %167 = tpu.matmul %166, %164, %cst_54 {dimension_numbers = #tpu.dot_dimension_numbers<[1], [0], [0], [1], [0, 0, 1, 1], [], []>} : vector<16x32xbf16>, vector<32x32xbf16>, vector<16x32xf32> -> vector<16x32xf32>
    %168 = arith.extf %165 : vector<1x32xbf16> to vector<1x32xf32>
    %169 = vector.broadcast %168 : vector<1x32xf32> to vector<16x32xf32>
    %170 = arith.addf %167, %169 : vector<16x32xf32>
    %c120 = arith.constant 120 : index
    %c0_55 = arith.constant 0 : index
    %171 = vector.load %arg5[%c120, %c0_55] : memref<376x128xbf16, #tpu.memory_space<vmem>>, vector<32x64xbf16>
    %c152 = arith.constant 152 : index
    %c0_56 = arith.constant 0 : index
    %172 = vector.load %arg5[%c152, %c0_56] : memref<376x128xbf16, #tpu.memory_space<vmem>>, vector<1x64xbf16>
    %173 = arith.truncf %1 : vector<16x32xf32> to vector<16x32xbf16>
    %cst_57 = arith.constant dense<0.000000e+00> : vector<16x64xf32>
    %174 = tpu.matmul %173, %171, %cst_57 {dimension_numbers = #tpu.dot_dimension_numbers<[1], [0], [0], [1], [0, 0, 1, 1], [], []>} : vector<16x32xbf16>, vector<32x64xbf16>, vector<16x64xf32> -> vector<16x64xf32>
    %175 = arith.extf %172 : vector<1x64xbf16> to vector<1x64xf32>
    %176 = vector.broadcast %175 : vector<1x64xf32> to vector<16x64xf32>
    %177 = arith.addf %174, %176 : vector<16x64xf32>
    %178 = vector.extract_strided_slice %177 {offsets = [0, 0], sizes = [16, 32], strides = [1, 1]} : vector<16x64xf32> to vector<16x32xf32>
    %179 = vector.extract_strided_slice %177 {offsets = [0, 32], sizes = [16, 32], strides = [1, 1]} : vector<16x64xf32> to vector<16x32xf32>
    %c0_58 = arith.constant 0 : index
    %c0_59 = arith.constant 0 : index
    %180 = vector.load %arg3[%c0_58, %c0_59] : memref<16x16xf32, #tpu.memory_space<vmem>>, vector<16x16xf32>
    %181 = arith.truncf %170 : vector<16x32xf32> to vector<16x32xbf16>
    %182 = arith.truncf %178 : vector<16x32xf32> to vector<16x32xbf16>
    %183 = arith.truncf %179 : vector<16x32xf32> to vector<16x32xbf16>
    %184 = vector.extract_strided_slice %181 {offsets = [0, 0], sizes = [16, 8], strides = [1, 1]} : vector<16x32xbf16> to vector<16x8xbf16>
    %185 = vector.extract_strided_slice %182 {offsets = [0, 0], sizes = [16, 8], strides = [1, 1]} : vector<16x32xbf16> to vector<16x8xbf16>
    %186 = tpu.transpose %185, [1, 0] : vector<16x8xbf16> -> vector<8x16xbf16>
    %cst_60 = arith.constant dense<0.000000e+00> : vector<16x16xf32>
    %187 = tpu.matmul %184, %186, %cst_60 {dimension_numbers = #tpu.dot_dimension_numbers<[1], [0], [0], [1], [0, 0, 1, 1], [], []>} : vector<16x8xbf16>, vector<8x16xbf16>, vector<16x16xf32> -> vector<16x16xf32>
    %cst_61 = arith.constant 0.353553385 : f32
    %188 = vector.broadcast %cst_61 : f32 to vector<16x16xf32>
    %189 = arith.mulf %187, %188 : vector<16x16xf32>
    %190 = arith.addf %189, %180 : vector<16x16xf32>
    %cst_62 = arith.constant dense<0xFF800000> : vector<16xf32>
    %191 = vector.multi_reduction <maximumf>, %190, %cst_62 [1] : vector<16x16xf32> to vector<16xf32>
    %192 = vector.shape_cast %191 : vector<16xf32> to vector<16x1xf32>
    %193 = vector.broadcast %192 : vector<16x1xf32> to vector<16x16xf32>
    %194 = arith.subf %190, %193 : vector<16x16xf32>
    %195 = math.exp %194 : vector<16x16xf32>
    %cst_63 = arith.constant dense<0.000000e+00> : vector<16xf32>
    %196 = vector.multi_reduction <add>, %195, %cst_63 [1] : vector<16x16xf32> to vector<16xf32>
    %197 = vector.shape_cast %196 : vector<16xf32> to vector<16x1xf32>
    %198 = tpu.reciprocal %197 {approx = true} : vector<16x1xf32> -> vector<16x1xf32>
    %199 = vector.broadcast %198 : vector<16x1xf32> to vector<16x16xf32>
    %200 = arith.mulf %195, %199 : vector<16x16xf32>
    %201 = arith.truncf %200 : vector<16x16xf32> to vector<16x16xbf16>
    %202 = vector.extract_strided_slice %183 {offsets = [0, 0], sizes = [16, 8], strides = [1, 1]} : vector<16x32xbf16> to vector<16x8xbf16>
    %cst_64 = arith.constant dense<0.000000e+00> : vector<16x8xf32>
    %203 = tpu.matmul %201, %202, %cst_64 {dimension_numbers = #tpu.dot_dimension_numbers<[1], [0], [0], [1], [0, 0, 1, 1], [], []>} : vector<16x16xbf16>, vector<16x8xbf16>, vector<16x8xf32> -> vector<16x8xf32>
    %204 = arith.truncf %203 : vector<16x8xf32> to vector<16x8xbf16>
    %c160 = arith.constant 160 : index
    %c0_65 = arith.constant 0 : index
    %205 = vector.load %arg5[%c160, %c0_65] : memref<376x128xbf16, #tpu.memory_space<vmem>>, vector<8x32xbf16>
    %cst_66 = arith.constant dense<0.000000e+00> : vector<16x32xf32>
    %206 = tpu.matmul %204, %205, %cst_66 {dimension_numbers = #tpu.dot_dimension_numbers<[1], [0], [0], [1], [0, 0, 1, 1], [], []>} : vector<16x8xbf16>, vector<8x32xbf16>, vector<16x32xf32> -> vector<16x32xf32>
    %207 = vector.extract_strided_slice %181 {offsets = [0, 8], sizes = [16, 8], strides = [1, 1]} : vector<16x32xbf16> to vector<16x8xbf16>
    %208 = vector.extract_strided_slice %182 {offsets = [0, 8], sizes = [16, 8], strides = [1, 1]} : vector<16x32xbf16> to vector<16x8xbf16>
    %209 = tpu.transpose %208, [1, 0] : vector<16x8xbf16> -> vector<8x16xbf16>
    %cst_67 = arith.constant dense<0.000000e+00> : vector<16x16xf32>
    %210 = tpu.matmul %207, %209, %cst_67 {dimension_numbers = #tpu.dot_dimension_numbers<[1], [0], [0], [1], [0, 0, 1, 1], [], []>} : vector<16x8xbf16>, vector<8x16xbf16>, vector<16x16xf32> -> vector<16x16xf32>
    %cst_68 = arith.constant 0.353553385 : f32
    %211 = vector.broadcast %cst_68 : f32 to vector<16x16xf32>
    %212 = arith.mulf %210, %211 : vector<16x16xf32>
    %213 = arith.addf %212, %180 : vector<16x16xf32>
    %cst_69 = arith.constant dense<0xFF800000> : vector<16xf32>
    %214 = vector.multi_reduction <maximumf>, %213, %cst_69 [1] : vector<16x16xf32> to vector<16xf32>
    %215 = vector.shape_cast %214 : vector<16xf32> to vector<16x1xf32>
    %216 = vector.broadcast %215 : vector<16x1xf32> to vector<16x16xf32>
    %217 = arith.subf %213, %216 : vector<16x16xf32>
    %218 = math.exp %217 : vector<16x16xf32>
    %cst_70 = arith.constant dense<0.000000e+00> : vector<16xf32>
    %219 = vector.multi_reduction <add>, %218, %cst_70 [1] : vector<16x16xf32> to vector<16xf32>
    %220 = vector.shape_cast %219 : vector<16xf32> to vector<16x1xf32>
    %221 = tpu.reciprocal %220 {approx = true} : vector<16x1xf32> -> vector<16x1xf32>
    %222 = vector.broadcast %221 : vector<16x1xf32> to vector<16x16xf32>
    %223 = arith.mulf %218, %222 : vector<16x16xf32>
    %224 = arith.truncf %223 : vector<16x16xf32> to vector<16x16xbf16>
    %225 = vector.extract_strided_slice %183 {offsets = [0, 8], sizes = [16, 8], strides = [1, 1]} : vector<16x32xbf16> to vector<16x8xbf16>
    %cst_71 = arith.constant dense<0.000000e+00> : vector<16x8xf32>
    %226 = tpu.matmul %224, %225, %cst_71 {dimension_numbers = #tpu.dot_dimension_numbers<[1], [0], [0], [1], [0, 0, 1, 1], [], []>} : vector<16x16xbf16>, vector<16x8xbf16>, vector<16x8xf32> -> vector<16x8xf32>
    %227 = arith.truncf %226 : vector<16x8xf32> to vector<16x8xbf16>
    %c168 = arith.constant 168 : index
    %c0_72 = arith.constant 0 : index
    %228 = vector.load %arg5[%c168, %c0_72] : memref<376x128xbf16, #tpu.memory_space<vmem>>, vector<8x32xbf16>
    %cst_73 = arith.constant dense<0.000000e+00> : vector<16x32xf32>
    %229 = tpu.matmul %227, %228, %cst_73 {dimension_numbers = #tpu.dot_dimension_numbers<[1], [0], [0], [1], [0, 0, 1, 1], [], []>} : vector<16x8xbf16>, vector<8x32xbf16>, vector<16x32xf32> -> vector<16x32xf32>
    %230 = arith.addf %206, %229 : vector<16x32xf32>
    %231 = vector.extract_strided_slice %181 {offsets = [0, 16], sizes = [16, 8], strides = [1, 1]} : vector<16x32xbf16> to vector<16x8xbf16>
    %232 = vector.extract_strided_slice %182 {offsets = [0, 16], sizes = [16, 8], strides = [1, 1]} : vector<16x32xbf16> to vector<16x8xbf16>
    %233 = tpu.transpose %232, [1, 0] : vector<16x8xbf16> -> vector<8x16xbf16>
    %cst_74 = arith.constant dense<0.000000e+00> : vector<16x16xf32>
    %234 = tpu.matmul %231, %233, %cst_74 {dimension_numbers = #tpu.dot_dimension_numbers<[1], [0], [0], [1], [0, 0, 1, 1], [], []>} : vector<16x8xbf16>, vector<8x16xbf16>, vector<16x16xf32> -> vector<16x16xf32>
    %cst_75 = arith.constant 0.353553385 : f32
    %235 = vector.broadcast %cst_75 : f32 to vector<16x16xf32>
    %236 = arith.mulf %234, %235 : vector<16x16xf32>
    %237 = arith.addf %236, %180 : vector<16x16xf32>
    %cst_76 = arith.constant dense<0xFF800000> : vector<16xf32>
    %238 = vector.multi_reduction <maximumf>, %237, %cst_76 [1] : vector<16x16xf32> to vector<16xf32>
    %239 = vector.shape_cast %238 : vector<16xf32> to vector<16x1xf32>
    %240 = vector.broadcast %239 : vector<16x1xf32> to vector<16x16xf32>
    %241 = arith.subf %237, %240 : vector<16x16xf32>
    %242 = math.exp %241 : vector<16x16xf32>
    %cst_77 = arith.constant dense<0.000000e+00> : vector<16xf32>
    %243 = vector.multi_reduction <add>, %242, %cst_77 [1] : vector<16x16xf32> to vector<16xf32>
    %244 = vector.shape_cast %243 : vector<16xf32> to vector<16x1xf32>
    %245 = tpu.reciprocal %244 {approx = true} : vector<16x1xf32> -> vector<16x1xf32>
    %246 = vector.broadcast %245 : vector<16x1xf32> to vector<16x16xf32>
    %247 = arith.mulf %242, %246 : vector<16x16xf32>
    %248 = arith.truncf %247 : vector<16x16xf32> to vector<16x16xbf16>
    %249 = vector.extract_strided_slice %183 {offsets = [0, 16], sizes = [16, 8], strides = [1, 1]} : vector<16x32xbf16> to vector<16x8xbf16>
    %cst_78 = arith.constant dense<0.000000e+00> : vector<16x8xf32>
    %250 = tpu.matmul %248, %249, %cst_78 {dimension_numbers = #tpu.dot_dimension_numbers<[1], [0], [0], [1], [0, 0, 1, 1], [], []>} : vector<16x16xbf16>, vector<16x8xbf16>, vector<16x8xf32> -> vector<16x8xf32>
    %251 = arith.truncf %250 : vector<16x8xf32> to vector<16x8xbf16>
    %c176 = arith.constant 176 : index
    %c0_79 = arith.constant 0 : index
    %252 = vector.load %arg5[%c176, %c0_79] : memref<376x128xbf16, #tpu.memory_space<vmem>>, vector<8x32xbf16>
    %cst_80 = arith.constant dense<0.000000e+00> : vector<16x32xf32>
    %253 = tpu.matmul %251, %252, %cst_80 {dimension_numbers = #tpu.dot_dimension_numbers<[1], [0], [0], [1], [0, 0, 1, 1], [], []>} : vector<16x8xbf16>, vector<8x32xbf16>, vector<16x32xf32> -> vector<16x32xf32>
    %254 = arith.addf %230, %253 : vector<16x32xf32>
    %255 = vector.extract_strided_slice %181 {offsets = [0, 24], sizes = [16, 8], strides = [1, 1]} : vector<16x32xbf16> to vector<16x8xbf16>
    %256 = vector.extract_strided_slice %182 {offsets = [0, 24], sizes = [16, 8], strides = [1, 1]} : vector<16x32xbf16> to vector<16x8xbf16>
    %257 = tpu.transpose %256, [1, 0] : vector<16x8xbf16> -> vector<8x16xbf16>
    %cst_81 = arith.constant dense<0.000000e+00> : vector<16x16xf32>
    %258 = tpu.matmul %255, %257, %cst_81 {dimension_numbers = #tpu.dot_dimension_numbers<[1], [0], [0], [1], [0, 0, 1, 1], [], []>} : vector<16x8xbf16>, vector<8x16xbf16>, vector<16x16xf32> -> vector<16x16xf32>
    %cst_82 = arith.constant 0.353553385 : f32
    %259 = vector.broadcast %cst_82 : f32 to vector<16x16xf32>
    %260 = arith.mulf %258, %259 : vector<16x16xf32>
    %261 = arith.addf %260, %180 : vector<16x16xf32>
    %cst_83 = arith.constant dense<0xFF800000> : vector<16xf32>
    %262 = vector.multi_reduction <maximumf>, %261, %cst_83 [1] : vector<16x16xf32> to vector<16xf32>
    %263 = vector.shape_cast %262 : vector<16xf32> to vector<16x1xf32>
    %264 = vector.broadcast %263 : vector<16x1xf32> to vector<16x16xf32>
    %265 = arith.subf %261, %264 : vector<16x16xf32>
    %266 = math.exp %265 : vector<16x16xf32>
    %cst_84 = arith.constant dense<0.000000e+00> : vector<16xf32>
    %267 = vector.multi_reduction <add>, %266, %cst_84 [1] : vector<16x16xf32> to vector<16xf32>
    %268 = vector.shape_cast %267 : vector<16xf32> to vector<16x1xf32>
    %269 = tpu.reciprocal %268 {approx = true} : vector<16x1xf32> -> vector<16x1xf32>
    %270 = vector.broadcast %269 : vector<16x1xf32> to vector<16x16xf32>
    %271 = arith.mulf %266, %270 : vector<16x16xf32>
    %272 = arith.truncf %271 : vector<16x16xf32> to vector<16x16xbf16>
    %273 = vector.extract_strided_slice %183 {offsets = [0, 24], sizes = [16, 8], strides = [1, 1]} : vector<16x32xbf16> to vector<16x8xbf16>
    %cst_85 = arith.constant dense<0.000000e+00> : vector<16x8xf32>
    %274 = tpu.matmul %272, %273, %cst_85 {dimension_numbers = #tpu.dot_dimension_numbers<[1], [0], [0], [1], [0, 0, 1, 1], [], []>} : vector<16x16xbf16>, vector<16x8xbf16>, vector<16x8xf32> -> vector<16x8xf32>
    %275 = arith.truncf %274 : vector<16x8xf32> to vector<16x8xbf16>
    %c184 = arith.constant 184 : index
    %c0_86 = arith.constant 0 : index
    %276 = vector.load %arg5[%c184, %c0_86] : memref<376x128xbf16, #tpu.memory_space<vmem>>, vector<8x32xbf16>
    %cst_87 = arith.constant dense<0.000000e+00> : vector<16x32xf32>
    %277 = tpu.matmul %275, %276, %cst_87 {dimension_numbers = #tpu.dot_dimension_numbers<[1], [0], [0], [1], [0, 0, 1, 1], [], []>} : vector<16x8xbf16>, vector<8x32xbf16>, vector<16x32xf32> -> vector<16x32xf32>
    %278 = arith.addf %254, %277 : vector<16x32xf32>
    %c192 = arith.constant 192 : index
    %c0_88 = arith.constant 0 : index
    %279 = vector.load %arg5[%c192, %c0_88] : memref<376x128xbf16, #tpu.memory_space<vmem>>, vector<1x32xbf16>
    %280 = arith.extf %279 : vector<1x32xbf16> to vector<1x32xf32>
    %281 = vector.broadcast %280 : vector<1x32xf32> to vector<16x32xf32>
    %282 = arith.addf %278, %281 : vector<16x32xf32>
    %283 = arith.addf %139, %282 : vector<16x32xf32>
    %cst_89 = arith.constant dense<0.000000e+00> : vector<16xf32>
    %284 = vector.multi_reduction <add>, %283, %cst_89 [1] : vector<16x32xf32> to vector<16xf32>
    %285 = vector.shape_cast %284 : vector<16xf32> to vector<16x1xf32>
    %cst_90 = arith.constant 3.200000e+01 : f32
    %286 = vector.broadcast %cst_90 : f32 to vector<16x1xf32>
    %287 = arith.divf %285, %286 : vector<16x1xf32>
    %288 = vector.broadcast %287 : vector<16x1xf32> to vector<16x32xf32>
    %289 = arith.subf %283, %288 : vector<16x32xf32>
    %290 = arith.mulf %289, %289 : vector<16x32xf32>
    %cst_91 = arith.constant dense<0.000000e+00> : vector<16xf32>
    %291 = vector.multi_reduction <add>, %290, %cst_91 [1] : vector<16x32xf32> to vector<16xf32>
    %292 = vector.shape_cast %291 : vector<16xf32> to vector<16x1xf32>
    %cst_92 = arith.constant 3.200000e+01 : f32
    %293 = vector.broadcast %cst_92 : f32 to vector<16x1xf32>
    %294 = arith.divf %292, %293 : vector<16x1xf32>
    %295 = vector.broadcast %287 : vector<16x1xf32> to vector<16x32xf32>
    %296 = arith.subf %283, %295 : vector<16x32xf32>
    %cst_93 = arith.constant 9.99999974E-6 : f32
    %297 = vector.broadcast %cst_93 : f32 to vector<16x1xf32>
    %298 = arith.addf %294, %297 : vector<16x1xf32>
    %299 = math.rsqrt %298 : vector<16x1xf32>
    %300 = vector.broadcast %299 : vector<16x1xf32> to vector<16x32xf32>
    %301 = arith.mulf %296, %300 : vector<16x32xf32>
    %c4 = arith.constant 4 : index
    %c0_94 = arith.constant 0 : index
    %302 = vector.load %arg4[%c4, %c0_94] : memref<6x32xf32, #tpu.memory_space<vmem>>, vector<1x32xf32>
    %303 = vector.broadcast %302 : vector<1x32xf32> to vector<16x32xf32>
    %304 = arith.mulf %301, %303 : vector<16x32xf32>
    %c5 = arith.constant 5 : index
    %c0_95 = arith.constant 0 : index
    %305 = vector.load %arg4[%c5, %c0_95] : memref<6x32xf32, #tpu.memory_space<vmem>>, vector<1x32xf32>
    %306 = vector.broadcast %305 : vector<1x32xf32> to vector<16x32xf32>
    %307 = arith.addf %304, %306 : vector<16x32xf32>
    %c200 = arith.constant 200 : index
    %c0_96 = arith.constant 0 : index
    %308 = vector.load %arg5[%c200, %c0_96] : memref<376x128xbf16, #tpu.memory_space<vmem>>, vector<32x128xbf16>
    %c232 = arith.constant 232 : index
    %c0_97 = arith.constant 0 : index
    %309 = vector.load %arg5[%c232, %c0_97] : memref<376x128xbf16, #tpu.memory_space<vmem>>, vector<1x128xbf16>
    %310 = arith.truncf %307 : vector<16x32xf32> to vector<16x32xbf16>
    %cst_98 = arith.constant dense<0.000000e+00> : vector<16x128xf32>
    %311 = tpu.matmul %310, %308, %cst_98 {dimension_numbers = #tpu.dot_dimension_numbers<[1], [0], [0], [1], [0, 0, 1, 1], [], []>} : vector<16x32xbf16>, vector<32x128xbf16>, vector<16x128xf32> -> vector<16x128xf32>
    %312 = arith.extf %309 : vector<1x128xbf16> to vector<1x128xf32>
    %313 = vector.broadcast %312 : vector<1x128xf32> to vector<16x128xf32>
    %314 = arith.addf %311, %313 : vector<16x128xf32>
    %cst_99 = arith.constant 0.000000e+00 : f32
    %315 = vector.broadcast %cst_99 : f32 to vector<16x128xf32>
    %316 = arith.maximumf %314, %315 : vector<16x128xf32>
    %c240 = arith.constant 240 : index
    %c0_100 = arith.constant 0 : index
    %317 = vector.load %arg5[%c240, %c0_100] : memref<376x128xbf16, #tpu.memory_space<vmem>>, vector<128x32xbf16>
    %c368 = arith.constant 368 : index
    %c0_101 = arith.constant 0 : index
    %318 = vector.load %arg5[%c368, %c0_101] : memref<376x128xbf16, #tpu.memory_space<vmem>>, vector<1x32xbf16>
    %319 = arith.truncf %316 : vector<16x128xf32> to vector<16x128xbf16>
    %cst_102 = arith.constant dense<0.000000e+00> : vector<16x32xf32>
    %320 = tpu.matmul %319, %317, %cst_102 {dimension_numbers = #tpu.dot_dimension_numbers<[1], [0], [0], [1], [0, 0, 1, 1], [], []>} : vector<16x128xbf16>, vector<128x32xbf16>, vector<16x32xf32> -> vector<16x32xf32>
    %321 = arith.extf %318 : vector<1x32xbf16> to vector<1x32xf32>
    %322 = vector.broadcast %321 : vector<1x32xf32> to vector<16x32xf32>
    %323 = arith.addf %320, %322 : vector<16x32xf32>
    %324 = arith.addf %283, %323 : vector<16x32xf32>
    %c0_103 = arith.constant 0 : index
    %c0_104 = arith.constant 0 : index
    %325 = vector.load %arg6[%c0_103, %c0_104] : memref<16x32xf32, #tpu.memory_space<vmem>>, vector<16x32xf32>
    tpu.vector_store %arg6[%c0_103, %c0_104], %324 {strides = array<i32>} : memref<16x32xf32, #tpu.memory_space<vmem>>, vector<16x32xf32>,
    return
  }
}

</mosaic_0001>

<llo_original>
// kernel: tpu_custom_call.1
$region0: #{tpu_custom_call.1}
  #allocation0 [shape = 'u32[]', space=smem, size = 0x4, offset = 0x4, fixed_abs, tag = 'smem constant byte address 0x4 - core index']
  #allocation1 [shape = 'u32[144,128]{1,0:T(1,128)}', space=vmem, size = 0x12000, scoped, tag = 'internal scratch']
  %s0 = inlined_call_operand.hbm [shape: f32[16,32], index: 0, kind: input, shape index: {}]
  %s1 = inlined_call_operand.hbm [shape: f32[16,32], index: 1, kind: input, shape index: {}]
  %s2 = inlined_call_operand.hbm [shape: f32[16,16], index: 2, kind: input, shape index: {}]
  %s3 = inlined_call_operand.hbm [shape: f32[16,16], index: 3, kind: input, shape index: {}]
  %s4 = inlined_call_operand.vmem [shape: f32[6,32], index: 4, kind: input, shape index: {}]
  %s5 = inlined_call_operand.hbm [shape: bf16[376,128], index: 5, kind: input, shape index: {}]
  %s6 = inlined_call_operand.hbm [shape: f32[16,32], index: 6, kind: output, shape index: {}]
  %s7 = sld [smem:[#allocation0]]
  $region54: #{tpu_custom_call.1} parent=0
    _
  %s9 = ssub.s32 1, %s7
  %s10 = scalar_select 0, %s9, %s7
  $region1: #{tpu_custom_call.1} parent=0
    #allocation2 [shape = 'u8[8192]{0}', space=vmem, size = 0x2000, scoped, tag = 'input window, operand 0, single buffered']
    #allocation3 [shape = 's32[1]{0}', space=sflag, size = 0x4, scoped, tag = 'scoped memory for tpu_custom_call.1']
    #allocation4 [shape = 's32[1]{0}', space=sflag, size = 0x4, scoped, tag = 'scoped memory for tpu_custom_call.1']
    #allocation5 [shape = 'u8[8192]{0}', space=vmem, size = 0x2000, scoped, tag = 'input window, operand 1, single buffered']
    #allocation6 [shape = 's32[1]{0}', space=sflag, size = 0x4, scoped, tag = 'scoped memory for tpu_custom_call.1']
    #allocation7 [shape = 'u8[8192]{0}', space=vmem, size = 0x2000, scoped, tag = 'input window, operand 2, single buffered']
    #allocation8 [shape = 'u8[8192]{0}', space=vmem, size = 0x2000, scoped, tag = 'input window, operand 3, single buffered']
    #allocation9 [shape = 's32[1]{0}', space=sflag, size = 0x4, scoped, tag = 'scoped memory for tpu_custom_call.1']
    #allocation10 [shape = 'u8[96256]{0}', space=vmem, size = 0x17800, scoped, tag = 'input window, operand 5, single buffered']
    #allocation11 [shape = 'u8[8192]{0}', space=vmem, size = 0x2000, scoped, tag = 'output window, operand 0, single buffered']
    %11 = vsyncpa [#allocation3], 0
    %12 = vsyncpa [#allocation6], 0
    %13 = vsyncpa [#allocation9], 0
    %14 = vsyncpa [#allocation4], 0
    // Predicated region
    $region2: #{tpu_custom_call.1} parent=1 // pred_check
      _
    $region3: #{tpu_custom_call.1} parent=1 // pred_check_branch
      %16 = sbr.rel (0) target = $region5
    $region4: #{tpu_custom_call.1} parent=1 // pred_region
      %s18 = ssub.s32 256, 256
      %19 = vsyncadd [#allocation3], %s18
      %s20 = sshll.u32 [#allocation2], 4
      %s21 = int_to_ptr.vmem [resolvable:$true] %s20
      %26 = dma.hbm_to_vmem [thread:$0]  %s0, 256, %s21, [#allocation3], 128, 128, 8
    $region5: #{tpu_custom_call.1} parent=1 // pred_fallthru
      _
    // Predicated region
    $region6: #{tpu_custom_call.1} parent=1 // pred_check
      _
    $region7: #{tpu_custom_call.1} parent=1 // pred_check_branch
      %28 = sbr.rel (0) target = $region9
    $region8: #{tpu_custom_call.1} parent=1 // pred_region
      %s30 = ssub.s32 256, 256
      %31 = vsyncadd [#allocation6], %s30
      %s32 = sshll.u32 [#allocation5], 4
      %s33 = int_to_ptr.vmem [resolvable:$true] %s32
      %38 = dma.hbm_to_vmem [thread:$0]  %s1, 256, %s33, [#allocation6], 128, 128, 8
    $region9: #{tpu_custom_call.1} parent=1 // pred_fallthru
      _
    // Predicated region
    $region10: #{tpu_custom_call.1} parent=1 // pred_check
      _
    $region11: #{tpu_custom_call.1} parent=1 // pred_check_branch
      %40 = sbr.rel (0) target = $region13
    $region12: #{tpu_custom_call.1} parent=1 // pred_region
      %s42 = ssub.s32 256, 256
      %43 = vsyncadd [#allocation6], %s42
      %s44 = sshll.u32 [#allocation7], 4
      %s45 = int_to_ptr.vmem [resolvable:$true] %s44
      %50 = dma.hbm_to_vmem [thread:$0]  %s2, 256, %s45, [#allocation6], 128, 128, 8
    $region13: #{tpu_custom_call.1} parent=1 // pred_fallthru
      _
    // Predicated region
    $region14: #{tpu_custom_call.1} parent=1 // pred_check
      _
    $region15: #{tpu_custom_call.1} parent=1 // pred_check_branch
      %52 = sbr.rel (0) target = $region17
    $region16: #{tpu_custom_call.1} parent=1 // pred_region
      %s54 = ssub.s32 256, 256
      %55 = vsyncadd [#allocation9], %s54
      %s56 = sshll.u32 [#allocation8], 4
      %s57 = int_to_ptr.vmem [resolvable:$true] %s56
      %62 = dma.hbm_to_vmem [thread:$0]  %s3, 256, %s57, [#allocation9], 128, 128, 8
    $region17: #{tpu_custom_call.1} parent=1 // pred_fallthru
      _
    // Predicated region
    $region18: #{tpu_custom_call.1} parent=1 // pred_check
      _
    $region19: #{tpu_custom_call.1} parent=1 // pred_check_branch
      %64 = sbr.rel (0) target = $region21
    $region20: #{tpu_custom_call.1} parent=1 // pred_region
      _
    $region21: #{tpu_custom_call.1} parent=1 // pred_fallthru
      _
    // Predicated region
    $region22: #{tpu_custom_call.1} parent=1 // pred_check
      _
    $region23: #{tpu_custom_call.1} parent=1 // pred_check_branch
      %66 = sbr.rel (0) target = $region25
    $region24: #{tpu_custom_call.1} parent=1 // pred_region
      %s68 = ssub.s32 3008, 3008
      %69 = vsyncadd [#allocation9], %s68
      %s70 = sshll.u32 [#allocation10], 4
      %s71 = int_to_ptr.vmem [resolvable:$true] %s70
      %76 = dma.hbm_to_vmem [thread:$0]  %s5, 3008, %s71, [#allocation9], 64, 64, 4
    $region25: #{tpu_custom_call.1} parent=1 // pred_fallthru
      _
    // Predicated region
    $region26: #{tpu_custom_call.1} parent=1 // pred_check
      _
    $region27: #{tpu_custom_call.1} parent=1 // pred_check_branch
      %78 = sbr.rel (0) target = $region29
    $region28: #{tpu_custom_call.1} parent=1 // pred_region
      %79 = dma.done [#allocation3], 256
    $region29: #{tpu_custom_call.1} parent=1 // pred_fallthru
      _
    // Predicated region
    $region30: #{tpu_custom_call.1} parent=1 // pred_check
      _
    $region31: #{tpu_custom_call.1} parent=1 // pred_check_branch
      %81 = sbr.rel (0) target = $region33
    $region32: #{tpu_custom_call.1} parent=1 // pred_region
      %82 = dma.done [#allocation6], 256
    $region33: #{tpu_custom_call.1} parent=1 // pred_fallthru
      _
    // Predicated region
    $region34: #{tpu_custom_call.1} parent=1 // pred_check
      _
    $region35: #{tpu_custom_call.1} parent=1 // pred_check_branch
      %84 = sbr.rel (0) target = $region37
    $region36: #{tpu_custom_call.1} parent=1 // pred_region
      %85 = dma.done [#allocation6], 256
    $region37: #{tpu_custom_call.1} parent=1 // pred_fallthru
      _
    // Predicated region
    $region38: #{tpu_custom_call.1} parent=1 // pred_check
      _
    $region39: #{tpu_custom_call.1} parent=1 // pred_check_branch
      %87 = sbr.rel (0) target = $region41
    $region40: #{tpu_custom_call.1} parent=1 // pred_region
      %88 = dma.done [#allocation9], 256
    $region41: #{tpu_custom_call.1} parent=1 // pred_fallthru
      _
    // Predicated region
    $region42: #{tpu_custom_call.1} parent=1 // pred_check
      _
    $region43: #{tpu_custom_call.1} parent=1 // pred_check_branch
      %90 = sbr.rel (0) target = $region45
    $region44: #{tpu_custom_call.1} parent=1 // pred_region
      %91 = dma.done [#allocation9], 3008
    $region45: #{tpu_custom_call.1} parent=1 // pred_fallthru
      _
    %v93 = vld [vmem:[#allocation2] sm:$0xff]
    %v94 = vld [vmem:[#allocation2 + $0x8] sm:$0xff]
    %v95 = vld [vmem:[#allocation5] sm:$0xff]
    %v96 = vld [vmem:[#allocation5 + $0x8] sm:$0xff]
    %vm97 = vcmask 261120
    %v98 = vsel %vm97, %v93, 0.0
    %99 = vadd.xlane.f32.xlu0 %v98
    %v100 = vpop.xlane.xlu0 %99
    %v101 = vsel %vm97, %v94, 0.0
    %102 = vadd.xlane.f32.xlu0 %v101
    %v103 = vpop.xlane.xlu0 %102
    %v104 = vrcp.pop 32.0
    %v105 = vmul.f32 %v100, %v104
    %v106 = vmul.f32 %v103, %v104
    %v107 = vsub.f32 %v93, %v105
    %v108 = vsub.f32 %v94, %v106
    %v109 = vmul.f32 %v107, %v107
    %v110 = vmul.f32 %v108, %v108
    %v111 = vsel %vm97, %v109, 0.0
    %112 = vadd.xlane.f32.xlu0 %v111
    %v113 = vpop.xlane.xlu0 %112
    %v114 = vsel %vm97, %v110, 0.0
    %115 = vadd.xlane.f32.xlu0 %v114
    %v116 = vpop.xlane.xlu0 %115
    %v117 = vmul.f32 %v113, %v104
    %v118 = vmul.f32 %v116, %v104
    %v119 = vadd.f32 %v117, 1e-05
    %v120 = vadd.f32 %v118, 1e-05
    %v121 = vrsqrt.pop %v119
    %v122 = vrsqrt.pop %v120
    %v123 = vmul.f32 %v107, %v121
    %v124 = vmul.f32 %v108, %v122
    %v125 = vld [vmem:[%s4] sm:$0x1]
    %v126 = vlaneseq
    %v127 = vshrl.u32 %v126, 7
    %v128 = vsub.s32 0, %v127
    %v129 = vrot.slane %v125, %v128
    %v130 = vmul.f32 %v123, %v129
    %v131 = vmul.f32 %v124, %v129
    %v132 = vld [vmem:[%s4 + $0x1] sm:$0x1]
    %v133 = vlaneseq
    %v134 = vshrl.u32 %v133, 7
    %v135 = vsub.s32 0, %v134
    %v136 = vrot.slane %v132, %v135
    %v137 = vadd.f32 %v130, %v136
    %v138 = vadd.f32 %v131, %v136
    %v139 = vld [vmem:[#allocation10] sm:$0xf]
    %v140 = vld [vmem:[#allocation10 + $0x4] sm:$0xf]
    %v141 = vld [vmem:[#allocation10 + $0x8] sm:$0xf]
    %v142 = vld [vmem:[#allocation10 + $0xc] sm:$0xf]
    %v143 = vld [vmem:[#allocation10 + $0x10] sm:$0x1]
    %v144 = vpack.c.bf16 %v138, %v137
    %v145 = vunpack.c.l.bf16 %v143
    %v146 = vlaneseq
    %v147 = vshrl.u32 %v146, 7
    %v148 = vsub.s32 0, %v147
    %v149 = vrot.slane %v145, %v148
    %v154 = vunpack.c.l.b16 %v139
    %v155 = vunpack.c.l.b16 %v140
    %v156 = vunpack.c.l.b16 %v141
    %v157 = vunpack.c.l.b16 %v142
    %v158 = vpack.c.b16 %v155, %v154
    %v159 = vpack.c.b16 %v157, %v156
    %v163 = vsel %vm97, %v144, 0
    %165 = vmatprep.subr.bf16.mxu0 0
    %166 = vmatpush1.bf16.msra.mxu0 %v158
    %167 = vmatprep.subr.bf16.mxu0 0
    %168 = vmatpush1.bf16.msra.mxu0 %v159
    %169 = vmatprep.subr.bf16.mxu0 0
    %170 = vmatpush1.bf16.msra.mxu0 0
    %171 = vmatprep.subr.bf16.mxu0 0
    %172 = vmatpush1.bf16.msra.mxu0 0
    %173 = vmatprep.subr.bf16.mxu0 0
    %174 = vmatpush1.bf16.msra.mxu0 0
    %175 = vmatprep.subr.bf16.mxu0 0
    %176 = vmatpush1.bf16.msra.mxu0 0
    %177 = vmatprep.subr.bf16.mxu0 0
    %178 = vmatpush1.bf16.msra.mxu0 0
    %179 = vmatprep.subr.bf16.mxu0 0
    %180 = vmatpush1.bf16.msra.mxu0 0
    %181 = vmatprep.subr.bf16.mxu0 0
    %182 = vmatpush1.bf16.msra.mxu0 0
    %183 = vmatprep.subr.bf16.mxu0 0
    %184 = vmatpush1.bf16.msra.mxu0 0
    %185 = vmatprep.subr.bf16.mxu0 0
    %186 = vmatpush1.bf16.msra.mxu0 0
    %187 = vmatprep.subr.bf16.mxu0 0
    %188 = vmatpush1.bf16.msra.mxu0 0
    %189 = vmatprep.subr.bf16.mxu0 0
    %190 = vmatpush1.bf16.msra.mxu0 0
    %191 = vmatprep.subr.bf16.mxu0 0
    %192 = vmatpush1.bf16.msra.mxu0 0
    %193 = vmatprep.subr.bf16.mxu0 0
    %194 = vmatpush1.bf16.msra.mxu0 0
    %195 = vmatprep.subr.bf16.mxu0 0
    %196 = vmatpush1.bf16.msra.mxu0 0
    %197 = vmatprep.mubr.bf16.mxu0 0
    %198 = vmatmul.mubr.bf16.gmra.mrb[0].mxu0 %v163
    %v199 = vpop.f32.mrb[0].mxu0
    %v200 = vadd.f32 %v149, %v199
    %v201 = vpop.f32.mrb[0].mxu0
    %v202 = vpop.f32.mrb[0].mxu0
    %v203 = vadd.f32 %v149, %v202
    %v204 = vpop.f32.mrb[0].mxu0
    %205 = vdwg.mxu0
    %v206 = vld [vmem:[#allocation7] sm:$0xff]
    %v207 = vld [vmem:[#allocation7 + $0x8] sm:$0xff]
    %v208 = vpack.c.bf16 %v203, %v200
    %210 = vrot.lane.b32.xlu0 %v208, 96
    %v211 = vpop.permute.xlu0 %210
    %vm212 = vcmask 64512
    %v214 = vsel %vm212, %v208, 0
    %v217 = vsel %vm212, %v211, 0
    %219 = vmatprep.subr.bf16.mxu0 0
    %220 = vmatpush1.bf16.xpose.msra.mxu0 %v217
    %221 = vmatprep.subr.bf16.mxu0 0
    %222 = vmatpush1.bf16.xpose.msra.mxu0 0
    %223 = vmatprep.subr.bf16.mxu0 0
    %224 = vmatpush1.bf16.xpose.msra.mxu0 0
    %225 = vmatprep.subr.bf16.mxu0 0
    %226 = vmatpush1.bf16.xpose.msra.mxu0 0
    %227 = vmatprep.subr.bf16.mxu0 0
    %228 = vmatpush1.bf16.xpose.msra.mxu0 0
    %229 = vmatprep.subr.bf16.mxu0 0
    %230 = vmatpush1.bf16.xpose.msra.mxu0 0
    %231 = vmatprep.subr.bf16.mxu0 0
    %232 = vmatpush1.bf16.xpose.msra.mxu0 0
    %233 = vmatprep.subr.bf16.mxu0 0
    %234 = vmatpush1.bf16.xpose.msra.mxu0 0
    %235 = vmatprep.subr.bf16.mxu0 0
    %236 = vmatpush1.bf16.xpose.msra.mxu0 0
    %237 = vmatprep.subr.bf16.mxu0 0
    %238 = vmatpush1.bf16.xpose.msra.mxu0 0
    %239 = vmatprep.subr.bf16.mxu0 0
    %240 = vmatpush1.bf16.xpose.msra.mxu0 0
    %241 = vmatprep.subr.bf16.mxu0 0
    %242 = vmatpush1.bf16.xpose.msra.mxu0 0
    %243 = vmatprep.subr.bf16.mxu0 0
    %244 = vmatpush1.bf16.xpose.msra.mxu0 0
    %245 = vmatprep.subr.bf16.mxu0 0
    %246 = vmatpush1.bf16.xpose.msra.mxu0 0
    %247 = vmatprep.subr.bf16.mxu0 0
    %248 = vmatpush1.bf16.xpose.msra.mxu0 0
    %249 = vmatprep.subr.bf16.mxu0 0
    %250 = vmatpush1.bf16.xpose.msra.mxu0 0
    %251 = vmatprep.mubr.bf16.mxu0 0
    %252 = vmatmul.mubr.bf16.gmra.mrb[0].mxu0 %v214
    %v253 = vpop.f32.mrb[0].mxu0
    %v254 = vadd.f32 0.0, %v253
    %v255 = vpop.f32.mrb[0].mxu0
    %v256 = vpop.f32.mrb[0].mxu0
    %v257 = vadd.f32 0.0, %v256
    %v258 = vpop.f32.mrb[0].mxu0
    %259 = vdwg.mxu0
    %v260 = vmul.f32 %v254, 0.35355338
    %v261 = vmul.f32 %v257, 0.35355338
    %v262 = vadd.f32 %v260, %v206
    %v263 = vadd.f32 %v261, %v207
    %vm264 = vcmask 130048
    %v265 = vsel %vm264, %v262, -inf
    %266 = vmax.xlane.f32.xlu0 %v265
    %v267 = vpop.xlane.xlu0 %266
    %v268 = vsel %vm264, %v263, -inf
    %269 = vmax.xlane.f32.xlu0 %v268
    %v270 = vpop.xlane.xlu0 %269
    %v271 = vsub.f32 %v262, %v267
    %v272 = vsub.f32 %v263, %v270
    %v273 = vmul.f32 %v271, 1.442695
    %v274 = vpow.pop %v273
    %v275 = vmul.f32 %v272, 1.442695
    %v276 = vpow.pop %v275
    %v277 = vsel %vm264, %v274, 0.0
    %278 = vadd.xlane.f32.xlu0 %v277
    %v279 = vpop.xlane.xlu0 %278
    %v280 = vsel %vm264, %v276, 0.0
    %281 = vadd.xlane.f32.xlu0 %v280
    %v282 = vpop.xlane.xlu0 %281
    %v283 = vrcp.pop %v279
    %v284 = vrcp.pop %v282
    %v285 = vmul.f32 %v274, %v283
    %v286 = vmul.f32 %v276, %v284
    %v287 = vpack.c.bf16 %v286, %v285
    %288 = vrot.lane.b32.xlu0 %v208, 64
    %v289 = vpop.permute.xlu0 %288
    %v292 = vsel %vm264, %v287, 0
    %294 = vmatprep.subr.bf16.mxu0 0
    %295 = vmatpush1.bf16.msra.mxu0 %v289
    %296 = vmatprep.subr.bf16.mxu0 0
    %297 = vmatpush1.bf16.msra.mxu0 0
    %298 = vmatprep.subr.bf16.mxu0 0
    %299 = vmatpush1.bf16.msra.mxu0 0
    %300 = vmatprep.subr.bf16.mxu0 0
    %301 = vmatpush1.bf16.msra.mxu0 0
    %302 = vmatprep.subr.bf16.mxu0 0
    %303 = vmatpush1.bf16.msra.mxu0 0
    %304 = vmatprep.subr.bf16.mxu0 0
    %305 = vmatpush1.bf16.msra.mxu0 0
    %306 = vmatprep.subr.bf16.mxu0 0
    %307 = vmatpush1.bf16.msra.mxu0 0
    %308 = vmatprep.subr.bf16.mxu0 0
    %309 = vmatpush1.bf16.msra.mxu0 0
    %310 = vmatprep.subr.bf16.mxu0 0
    %311 = vmatpush1.bf16.msra.mxu0 0
    %312 = vmatprep.subr.bf16.mxu0 0
    %313 = vmatpush1.bf16.msra.mxu0 0
    %314 = vmatprep.subr.bf16.mxu0 0
    %315 = vmatpush1.bf16.msra.mxu0 0
    %316 = vmatprep.subr.bf16.mxu0 0
    %317 = vmatpush1.bf16.msra.mxu0 0
    %318 = vmatprep.subr.bf16.mxu0 0
    %319 = vmatpush1.bf16.msra.mxu0 0
    %320 = vmatprep.subr.bf16.mxu0 0
    %321 = vmatpush1.bf16.msra.mxu0 0
    %322 = vmatprep.subr.bf16.mxu0 0
    %323 = vmatpush1.bf16.msra.mxu0 0
    %324 = vmatprep.subr.bf16.mxu0 0
    %325 = vmatpush1.bf16.msra.mxu0 0
    %326 = vmatprep.mubr.bf16.mxu0 0
    %327 = vmatmul.mubr.bf16.gmra.mrb[0].mxu0 %v292
    %v328 = vpop.f32.mrb[0].mxu0
    %v329 = vadd.f32 0.0, %v328
    %v330 = vpop.f32.mrb[0].mxu0
    %v331 = vpop.f32.mrb[0].mxu0
    %v332 = vadd.f32 0.0, %v331
    %v333 = vpop.f32.mrb[0].mxu0
    %334 = vdwg.mxu0
    %v335 = vpack.c.bf16 %v332, %v329
    %v336 = vld [vmem:[#allocation10 + $0x14] sm:$0xf]
    %337 = vrot.lane.b32.xlu0 %v208, 120
    %v338 = vpop.permute.xlu0 %337
    %339 = vrot.lane.b32.xlu0 %v208, 88
    %v340 = vpop.permute.xlu0 %339
    %v342 = vsel %vm212, %v338, 0
    %v345 = vsel %vm212, %v340, 0
    %347 = vmatprep.subr.bf16.mxu0 0
    %348 = vmatpush1.bf16.xpose.msra.mxu0 %v345
    %349 = vmatprep.subr.bf16.mxu0 0
    %350 = vmatpush1.bf16.xpose.msra.mxu0 0
    %351 = vmatprep.subr.bf16.mxu0 0
    %352 = vmatpush1.bf16.xpose.msra.mxu0 0
    %353 = vmatprep.subr.bf16.mxu0 0
    %354 = vmatpush1.bf16.xpose.msra.mxu0 0
    %355 = vmatprep.subr.bf16.mxu0 0
    %356 = vmatpush1.bf16.xpose.msra.mxu0 0
    %357 = vmatprep.subr.bf16.mxu0 0
    %358 = vmatpush1.bf16.xpose.msra.mxu0 0
    %359 = vmatprep.subr.bf16.mxu0 0
    %360 = vmatpush1.bf16.xpose.msra.mxu0 0
    %361 = vmatprep.subr.bf16.mxu0 0
    %362 = vmatpush1.bf16.xpose.msra.mxu0 0
    %363 = vmatprep.subr.bf16.mxu0 0
    %364 = vmatpush1.bf16.xpose.msra.mxu0 0
    %365 = vmatprep.subr.bf16.mxu0 0
    %366 = vmatpush1.bf16.xpose.msra.mxu0 0
    %367 = vmatprep.subr.bf16.mxu0 0
    %368 = vmatpush1.bf16.xpose.msra.mxu0 0
    %369 = vmatprep.subr.bf16.mxu0 0
    %370 = vmatpush1.bf16.xpose.msra.mxu0 0
    %371 = vmatprep.subr.bf16.mxu0 0
    %372 = vmatpush1.bf16.xpose.msra.mxu0 0
    %373 = vmatprep.subr.bf16.mxu0 0
    %374 = vmatpush1.bf16.xpose.msra.mxu0 0
    %375 = vmatprep.subr.bf16.mxu0 0
    %376 = vmatpush1.bf16.xpose.msra.mxu0 0
    %377 = vmatprep.subr.bf16.mxu0 0
    %378 = vmatpush1.bf16.xpose.msra.mxu0 0
    %379 = vmatprep.mubr.bf16.mxu0 0
    %380 = vmatmul.mubr.bf16.gmra.mrb[0].mxu0 %v342
    %v381 = vpop.f32.mrb[0].mxu0
    %v382 = vadd.f32 0.0, %v381
    %v383 = vpop.f32.mrb[0].mxu0
    %v384 = vpop.f32.mrb[0].mxu0
    %v385 = vadd.f32 0.0, %v384
    %v386 = vpop.f32.mrb[0].mxu0
    %387 = vdwg.mxu0
    %v388 = vmul.f32 %v382, 0.35355338
    %v389 = vmul.f32 %v385, 0.35355338
    %v390 = vadd.f32 %v388, %v206
    %v391 = vadd.f32 %v389, %v207
    %v392 = vsel %vm264, %v390, -inf
    %393 = vmax.xlane.f32.xlu0 %v392
    %v394 = vpop.xlane.xlu0 %393
    %v395 = vsel %vm264, %v391, -inf
    %396 = vmax.xlane.f32.xlu0 %v395
    %v397 = vpop.xlane.xlu0 %396
    %v398 = vsub.f32 %v390, %v394
    %v399 = vsub.f32 %v391, %v397
    %v400 = vmul.f32 %v398, 1.442695
    %v401 = vpow.pop %v400
    %v402 = vmul.f32 %v399, 1.442695
    %v403 = vpow.pop %v402
    %v404 = vsel %vm264, %v401, 0.0
    %405 = vadd.xlane.f32.xlu0 %v404
    %v406 = vpop.xlane.xlu0 %405
    %v407 = vsel %vm264, %v403, 0.0
    %408 = vadd.xlane.f32.xlu0 %v407
    %v409 = vpop.xlane.xlu0 %408
    %v410 = vrcp.pop %v406
    %v411 = vrcp.pop %v409
    %v412 = vmul.f32 %v401, %v410
    %v413 = vmul.f32 %v403, %v411
    %v414 = vpack.c.bf16 %v413, %v412
    %415 = vrot.lane.b32.xlu0 %v208, 56
    %v416 = vpop.permute.xlu0 %415
    %v419 = vsel %vm264, %v414, 0
    %421 = vmatprep.subr.bf16.mxu0 0
    %422 = vmatpush1.bf16.msra.mxu0 %v416
    %423 = vmatprep.subr.bf16.mxu0 0
    %424 = vmatpush1.bf16.msra.mxu0 0
    %425 = vmatprep.subr.bf16.mxu0 0
    %426 = vmatpush1.bf16.msra.mxu0 0
    %427 = vmatprep.subr.bf16.mxu0 0
    %428 = vmatpush1.bf16.msra.mxu0 0
    %429 = vmatprep.subr.bf16.mxu0 0
    %430 = vmatpush1.bf16.msra.mxu0 0
    %431 = vmatprep.subr.bf16.mxu0 0
    %432 = vmatpush1.bf16.msra.mxu0 0
    %433 = vmatprep.subr.bf16.mxu0 0
    %434 = vmatpush1.bf16.msra.mxu0 0
    %435 = vmatprep.subr.bf16.mxu0 0
    %436 = vmatpush1.bf16.msra.mxu0 0
    %437 = vmatprep.subr.bf16.mxu0 0
    %438 = vmatpush1.bf16.msra.mxu0 0
    %439 = vmatprep.subr.bf16.mxu0 0
    %440 = vmatpush1.bf16.msra.mxu0 0
    %441 = vmatprep.subr.bf16.mxu0 0
    %442 = vmatpush1.bf16.msra.mxu0 0
    %443 = vmatprep.subr.bf16.mxu0 0
    %444 = vmatpush1.bf16.msra.mxu0 0
    %445 = vmatprep.subr.bf16.mxu0 0
    %446 = vmatpush1.bf16.msra.mxu0 0
    %447 = vmatprep.subr.bf16.mxu0 0
    %448 = vmatpush1.bf16.msra.mxu0 0
    %449 = vmatprep.subr.bf16.mxu0 0
    %450 = vmatpush1.bf16.msra.mxu0 0
    %451 = vmatprep.subr.bf16.mxu0 0
    %452 = vmatpush1.bf16.msra.mxu0 0
    %453 = vmatprep.mubr.bf16.mxu0 0
    %454 = vmatmul.mubr.bf16.gmra.mrb[0].mxu0 %v419
    %v455 = vpop.f32.mrb[0].mxu0
    %v456 = vadd.f32 0.0, %v455
    %v457 = vpop.f32.mrb[0].mxu0
    %v458 = vpop.f32.mrb[0].mxu0
    %v459 = vadd.f32 0.0, %v458
    %v460 = vpop.f32.mrb[0].mxu0
    %461 = vdwg.mxu0
    %v462 = vpack.c.bf16 %v459, %v456
    %v463 = vld [vmem:[#allocation10 + $0x18] sm:$0xf]
    %v465 = vsel %vm212, %v462, 0
    %vm467 = vcmask 1043456
    %v469 = vsel %vm467, %v463, 0
    %471 = vmatprep.subr.bf16.mxu0 0
    %472 = vmatpush1.bf16.msra.mxu0 %v469
    %473 = vmatprep.subr.bf16.mxu0 0
    %474 = vmatpush1.bf16.msra.mxu0 0
    %475 = vmatprep.subr.bf16.mxu0 0
    %476 = vmatpush1.bf16.msra.mxu0 0
    %477 = vmatprep.subr.bf16.mxu0 0
    %478 = vmatpush1.bf16.msra.mxu0 0
    %479 = vmatprep.subr.bf16.mxu0 0
    %480 = vmatpush1.bf16.msra.mxu0 0
    %481 = vmatprep.subr.bf16.mxu0 0
    %482 = vmatpush1.bf16.msra.mxu0 0
    %483 = vmatprep.subr.bf16.mxu0 0
    %484 = vmatpush1.bf16.msra.mxu0 0
    %485 = vmatprep.subr.bf16.mxu0 0
    %486 = vmatpush1.bf16.msra.mxu0 0
    %487 = vmatprep.subr.bf16.mxu0 0
    %488 = vmatpush1.bf16.msra.mxu0 0
    %489 = vmatprep.subr.bf16.mxu0 0
    %490 = vmatpush1.bf16.msra.mxu0 0
    %491 = vmatprep.subr.bf16.mxu0 0
    %492 = vmatpush1.bf16.msra.mxu0 0
    %493 = vmatprep.subr.bf16.mxu0 0
    %494 = vmatpush1.bf16.msra.mxu0 0
    %495 = vmatprep.subr.bf16.mxu0 0
    %496 = vmatpush1.bf16.msra.mxu0 0
    %497 = vmatprep.subr.bf16.mxu0 0
    %498 = vmatpush1.bf16.msra.mxu0 0
    %499 = vmatprep.subr.bf16.mxu0 0
    %500 = vmatpush1.bf16.msra.mxu0 0
    %501 = vmatprep.subr.bf16.mxu0 0
    %502 = vmatpush1.bf16.msra.mxu0 0
    %503 = vmatprep.mubr.bf16.mxu0 0
    %504 = vmatmul.mubr.bf16.gmra.mrb[0].mxu0 %v465
    %v505 = vpop.f32.mrb[0].mxu0
    %v506 = vadd.f32 0.0, %v505
    %v507 = vpop.f32.mrb[0].mxu0
    %v508 = vpop.f32.mrb[0].mxu0
    %v509 = vadd.f32 0.0, %v508
    %v510 = vpop.f32.mrb[0].mxu0
    %511 = vdwg.mxu0
    %v513 = vsel %vm212, %v335, 0
    %v516 = vsel %vm467, %v336, 0
    %518 = vmatprep.subr.bf16.mxu0 0
    %519 = vmatpush1.bf16.msra.mxu0 %v516
    %520 = vmatprep.subr.bf16.mxu0 0
    %521 = vmatpush1.bf16.msra.mxu0 0
    %522 = vmatprep.subr.bf16.mxu0 0
    %523 = vmatpush1.bf16.msra.mxu0 0
    %524 = vmatprep.subr.bf16.mxu0 0
    %525 = vmatpush1.bf16.msra.mxu0 0
    %526 = vmatprep.subr.bf16.mxu0 0
    %527 = vmatpush1.bf16.msra.mxu0 0
    %528 = vmatprep.subr.bf16.mxu0 0
    %529 = vmatpush1.bf16.msra.mxu0 0
    %530 = vmatprep.subr.bf16.mxu0 0
    %531 = vmatpush1.bf16.msra.mxu0 0
    %532 = vmatprep.subr.bf16.mxu0 0
    %533 = vmatpush1.bf16.msra.mxu0 0
    %534 = vmatprep.subr.bf16.mxu0 0
    %535 = vmatpush1.bf16.msra.mxu0 0
    %536 = vmatprep.subr.bf16.mxu0 0
    %537 = vmatpush1.bf16.msra.mxu0 0
    %538 = vmatprep.subr.bf16.mxu0 0
    %539 = vmatpush1.bf16.msra.mxu0 0
    %540 = vmatprep.subr.bf16.mxu0 0
    %541 = vmatpush1.bf16.msra.mxu0 0
    %542 = vmatprep.subr.bf16.mxu0 0
    %543 = vmatpush1.bf16.msra.mxu0 0
    %544 = vmatprep.subr.bf16.mxu0 0
    %545 = vmatpush1.bf16.msra.mxu0 0
    %546 = vmatprep.subr.bf16.mxu0 0
    %547 = vmatpush1.bf16.msra.mxu0 0
    %548 = vmatprep.subr.bf16.mxu0 0
    %549 = vmatpush1.bf16.msra.mxu0 0
    %550 = vmatprep.mubr.bf16.mxu0 0
    %551 = vmatmul.mubr.bf16.gmra.mrb[0].mxu0 %v513
    %v552 = vpop.f32.mrb[0].mxu0
    %v553 = vadd.f32 %v506, %v552
    %v554 = vpop.f32.mrb[0].mxu0
    %v555 = vpop.f32.mrb[0].mxu0
    %v556 = vadd.f32 %v509, %v555
    %v557 = vpop.f32.mrb[0].mxu0
    %558 = vdwg.mxu0
    %559 = vrot.lane.b32.xlu0 %v208, 112
    %v560 = vpop.permute.xlu0 %559
    %561 = vrot.lane.b32.xlu0 %v208, 80
    %v562 = vpop.permute.xlu0 %561
    %v564 = vsel %vm212, %v560, 0
    %v567 = vsel %vm212, %v562, 0
    %569 = vmatprep.subr.bf16.mxu0 0
    %570 = vmatpush1.bf16.xpose.msra.mxu0 %v567
    %571 = vmatprep.subr.bf16.mxu0 0
    %572 = vmatpush1.bf16.xpose.msra.mxu0 0
    %573 = vmatprep.subr.bf16.mxu0 0
    %574 = vmatpush1.bf16.xpose.msra.mxu0 0
    %575 = vmatprep.subr.bf16.mxu0 0
    %576 = vmatpush1.bf16.xpose.msra.mxu0 0
    %577 = vmatprep.subr.bf16.mxu0 0
    %578 = vmatpush1.bf16.xpose.msra.mxu0 0
    %579 = vmatprep.subr.bf16.mxu0 0
    %580 = vmatpush1.bf16.xpose.msra.mxu0 0
    %581 = vmatprep.subr.bf16.mxu0 0
    %582 = vmatpush1.bf16.xpose.msra.mxu0 0
    %583 = vmatprep.subr.bf16.mxu0 0
    %584 = vmatpush1.bf16.xpose.msra.mxu0 0
    %585 = vmatprep.subr.bf16.mxu0 0
    %586 = vmatpush1.bf16.xpose.msra.mxu0 0
    %587 = vmatprep.subr.bf16.mxu0 0
    %588 = vmatpush1.bf16.xpose.msra.mxu0 0
    %589 = vmatprep.subr.bf16.mxu0 0
    %590 = vmatpush1.bf16.xpose.msra.mxu0 0
    %591 = vmatprep.subr.bf16.mxu0 0
    %592 = vmatpush1.bf16.xpose.msra.mxu0 0
    %593 = vmatprep.subr.bf16.mxu0 0
    %594 = vmatpush1.bf16.xpose.msra.mxu0 0
    %595 = vmatprep.subr.bf16.mxu0 0
    %596 = vmatpush1.bf16.xpose.msra.mxu0 0
    %597 = vmatprep.subr.bf16.mxu0 0
    %598 = vmatpush1.bf16.xpose.msra.mxu0 0
    %599 = vmatprep.subr.bf16.mxu0 0
    %600 = vmatpush1.bf16.xpose.msra.mxu0 0
    %601 = vmatprep.mubr.bf16.mxu0 0
    %602 = vmatmul.mubr.bf16.gmra.mrb[0].mxu0 %v564
    %v603 = vpop.f32.mrb[0].mxu0
    %v604 = vadd.f32 0.0, %v603
    %v605 = vpop.f32.mrb[0].mxu0
    %v606 = vpop.f32.mrb[0].mxu0
    %v607 = vadd.f32 0.0, %v606
    %v608 = vpop.f32.mrb[0].mxu0
    %609 = vdwg.mxu0
    %v610 = vmul.f32 %v604, 0.35355338
    %v611 = vmul.f32 %v607, 0.35355338
    %v612 = vadd.f32 %v610, %v206
    %v613 = vadd.f32 %v611, %v207
    %v614 = vsel %vm264, %v612, -inf
    %615 = vmax.xlane.f32.xlu0 %v614
    %v616 = vpop.xlane.xlu0 %615
    %v617 = vsel %vm264, %v613, -inf
    %618 = vmax.xlane.f32.xlu0 %v617
    %v619 = vpop.xlane.xlu0 %618
    %v620 = vsub.f32 %v612, %v616
    %v621 = vsub.f32 %v613, %v619
    %v622 = vmul.f32 %v620, 1.442695
    %v623 = vpow.pop %v622
    %v624 = vmul.f32 %v621, 1.442695
    %v625 = vpow.pop %v624
    %v626 = vsel %vm264, %v623, 0.0
    %627 = vadd.xlane.f32.xlu0 %v626
    %v628 = vpop.xlane.xlu0 %627
    %v629 = vsel %vm264, %v625, 0.0
    %630 = vadd.xlane.f32.xlu0 %v629
    %v631 = vpop.xlane.xlu0 %630
    %v632 = vrcp.pop %v628
    %v633 = vrcp.pop %v631
    %v634 = vmul.f32 %v623, %v632
    %v635 = vmul.f32 %v625, %v633
    %v636 = vpack.c.bf16 %v635, %v634
    %637 = vrot.lane.b32.xlu0 %v208, 48
    %v638 = vpop.permute.xlu0 %637
    %v641 = vsel %vm264, %v636, 0
    %643 = vmatprep.subr.bf16.mxu0 0
    %644 = vmatpush1.bf16.msra.mxu0 %v638
    %645 = vmatprep.subr.bf16.mxu0 0
    %646 = vmatpush1.bf16.msra.mxu0 0
    %647 = vmatprep.subr.bf16.mxu0 0
    %648 = vmatpush1.bf16.msra.mxu0 0
    %649 = vmatprep.subr.bf16.mxu0 0
    %650 = vmatpush1.bf16.msra.mxu0 0
    %651 = vmatprep.subr.bf16.mxu0 0
    %652 = vmatpush1.bf16.msra.mxu0 0
    %653 = vmatprep.subr.bf16.mxu0 0
    %654 = vmatpush1.bf16.msra.mxu0 0
    %655 = vmatprep.subr.bf16.mxu0 0
    %656 = vmatpush1.bf16.msra.mxu0 0
    %657 = vmatprep.subr.bf16.mxu0 0
    %658 = vmatpush1.bf16.msra.mxu0 0
    %659 = vmatprep.subr.bf16.mxu0 0
    %660 = vmatpush1.bf16.msra.mxu0 0
    %661 = vmatprep.subr.bf16.mxu0 0
    %662 = vmatpush1.bf16.msra.mxu0 0
    %663 = vmatprep.subr.bf16.mxu0 0
    %664 = vmatpush1.bf16.msra.mxu0 0
    %665 = vmatprep.subr.bf16.mxu0 0
    %666 = vmatpush1.bf16.msra.mxu0 0
    %667 = vmatprep.subr.bf16.mxu0 0
    %668 = vmatpush1.bf16.msra.mxu0 0
    %669 = vmatprep.subr.bf16.mxu0 0
    %670 = vmatpush1.bf16.msra.mxu0 0
    %671 = vmatprep.subr.bf16.mxu0 0
    %672 = vmatpush1.bf16.msra.mxu0 0
    %673 = vmatprep.subr.bf16.mxu0 0
    %674 = vmatpush1.bf16.msra.mxu0 0
    %675 = vmatprep.mubr.bf16.mxu0 0
    %676 = vmatmul.mubr.bf16.gmra.mrb[0].mxu0 %v641
    %v677 = vpop.f32.mrb[0].mxu0
    %v678 = vadd.f32 0.0, %v677
    %v679 = vpop.f32.mrb[0].mxu0
    %v680 = vpop.f32.mrb[0].mxu0
    %v681 = vadd.f32 0.0, %v680
    %v682 = vpop.f32.mrb[0].mxu0
    %683 = vdwg.mxu0
    %v684 = vpack.c.bf16 %v681, %v678
    %v685 = vld [vmem:[#allocation10 + $0x1c] sm:$0xf]
    %v687 = vsel %vm212, %v684, 0
    %v690 = vsel %vm467, %v685, 0
    %692 = vmatprep.subr.bf16.mxu0 0
    %693 = vmatpush1.bf16.msra.mxu0 %v690
    %694 = vmatprep.subr.bf16.mxu0 0
    %695 = vmatpush1.bf16.msra.mxu0 0
    %696 = vmatprep.subr.bf16.mxu0 0
    %697 = vmatpush1.bf16.msra.mxu0 0
    %698 = vmatprep.subr.bf16.mxu0 0
    %699 = vmatpush1.bf16.msra.mxu0 0
    %700 = vmatprep.subr.bf16.mxu0 0
    %701 = vmatpush1.bf16.msra.mxu0 0
    %702 = vmatprep.subr.bf16.mxu0 0
    %703 = vmatpush1.bf16.msra.mxu0 0
    %704 = vmatprep.subr.bf16.mxu0 0
    %705 = vmatpush1.bf16.msra.mxu0 0
    %706 = vmatprep.subr.bf16.mxu0 0
    %707 = vmatpush1.bf16.msra.mxu0 0
    %708 = vmatprep.subr.bf16.mxu0 0
    %709 = vmatpush1.bf16.msra.mxu0 0
    %710 = vmatprep.subr.bf16.mxu0 0
    %711 = vmatpush1.bf16.msra.mxu0 0
    %712 = vmatprep.subr.bf16.mxu0 0
    %713 = vmatpush1.bf16.msra.mxu0 0
    %714 = vmatprep.subr.bf16.mxu0 0
    %715 = vmatpush1.bf16.msra.mxu0 0
    %716 = vmatprep.subr.bf16.mxu0 0
    %717 = vmatpush1.bf16.msra.mxu0 0
    %718 = vmatprep.subr.bf16.mxu0 0
    %719 = vmatpush1.bf16.msra.mxu0 0
    %720 = vmatprep.subr.bf16.mxu0 0
    %721 = vmatpush1.bf16.msra.mxu0 0
    %722 = vmatprep.subr.bf16.mxu0 0
    %723 = vmatpush1.bf16.msra.mxu0 0
    %724 = vmatprep.mubr.bf16.mxu0 0
    %725 = vmatmul.mubr.bf16.gmra.mrb[0].mxu0 %v687
    %v726 = vpop.f32.mrb[0].mxu0
    %v727 = vadd.f32 0.0, %v726
    %v728 = vpop.f32.mrb[0].mxu0
    %v729 = vpop.f32.mrb[0].mxu0
    %v730 = vadd.f32 0.0, %v729
    %v731 = vpop.f32.mrb[0].mxu0
    %732 = vdwg.mxu0
    %v733 = vadd.f32 %v553, %v727
    %v734 = vadd.f32 %v556, %v730
    %735 = vrot.lane.b32.xlu0 %v208, 104
    %v736 = vpop.permute.xlu0 %735
    %737 = vrot.lane.b32.xlu0 %v208, 72
    %v738 = vpop.permute.xlu0 %737
    %v740 = vsel %vm212, %v736, 0
    %v743 = vsel %vm212, %v738, 0
    %745 = vmatprep.subr.bf16.mxu0 0
    %746 = vmatpush1.bf16.xpose.msra.mxu0 %v743
    %747 = vmatprep.subr.bf16.mxu0 0
    %748 = vmatpush1.bf16.xpose.msra.mxu0 0
    %749 = vmatprep.subr.bf16.mxu0 0
    %750 = vmatpush1.bf16.xpose.msra.mxu0 0
    %751 = vmatprep.subr.bf16.mxu0 0
    %752 = vmatpush1.bf16.xpose.msra.mxu0 0
    %753 = vmatprep.subr.bf16.mxu0 0
    %754 = vmatpush1.bf16.xpose.msra.mxu0 0
    %755 = vmatprep.subr.bf16.mxu0 0
    %756 = vmatpush1.bf16.xpose.msra.mxu0 0
    %757 = vmatprep.subr.bf16.mxu0 0
    %758 = vmatpush1.bf16.xpose.msra.mxu0 0
    %759 = vmatprep.subr.bf16.mxu0 0
    %760 = vmatpush1.bf16.xpose.msra.mxu0 0
    %761 = vmatprep.subr.bf16.mxu0 0
    %762 = vmatpush1.bf16.xpose.msra.mxu0 0
    %763 = vmatprep.subr.bf16.mxu0 0
    %764 = vmatpush1.bf16.xpose.msra.mxu0 0
    %765 = vmatprep.subr.bf16.mxu0 0
    %766 = vmatpush1.bf16.xpose.msra.mxu0 0
    %767 = vmatprep.subr.bf16.mxu0 0
    %768 = vmatpush1.bf16.xpose.msra.mxu0 0
    %769 = vmatprep.subr.bf16.mxu0 0
    %770 = vmatpush1.bf16.xpose.msra.mxu0 0
    %771 = vmatprep.subr.bf16.mxu0 0
    %772 = vmatpush1.bf16.xpose.msra.mxu0 0
    %773 = vmatprep.subr.bf16.mxu0 0
    %774 = vmatpush1.bf16.xpose.msra.mxu0 0
    %775 = vmatprep.subr.bf16.mxu0 0
    %776 = vmatpush1.bf16.xpose.msra.mxu0 0
    %777 = vmatprep.mubr.bf16.mxu0 0
    %778 = vmatmul.mubr.bf16.gmra.mrb[0].mxu0 %v740
    %v779 = vpop.f32.mrb[0].mxu0
    %v780 = vadd.f32 0.0, %v779
    %v781 = vpop.f32.mrb[0].mxu0
    %v782 = vpop.f32.mrb[0].mxu0
    %v783 = vadd.f32 0.0, %v782
    %v784 = vpop.f32.mrb[0].mxu0
    %785 = vdwg.mxu0
    %v786 = vmul.f32 %v780, 0.35355338
    %v787 = vmul.f32 %v783, 0.35355338
    %v788 = vadd.f32 %v786, %v206
    %v789 = vadd.f32 %v787, %v207
    %v790 = vsel %vm264, %v788, -inf
    %791 = vmax.xlane.f32.xlu0 %v790
    %v792 = vpop.xlane.xlu0 %791
    %v793 = vsel %vm264, %v789, -inf
    %794 = vmax.xlane.f32.xlu0 %v793
    %v795 = vpop.xlane.xlu0 %794
    %v796 = vsub.f32 %v788, %v792
    %v797 = vsub.f32 %v789, %v795
    %v798 = vmul.f32 %v796, 1.442695
    %v799 = vpow.pop %v798
    %v800 = vmul.f32 %v797, 1.442695
    %v801 = vpow.pop %v800
    %v802 = vsel %vm264, %v799, 0.0
    %803 = vadd.xlane.f32.xlu0 %v802
    %v804 = vpop.xlane.xlu0 %803
    %v805 = vsel %vm264, %v801, 0.0
    %806 = vadd.xlane.f32.xlu0 %v805
    %v807 = vpop.xlane.xlu0 %806
    %v808 = vrcp.pop %v804
    %v809 = vrcp.pop %v807
    %v810 = vmul.f32 %v799, %v808
    %v811 = vmul.f32 %v801, %v809
    %v812 = vpack.c.bf16 %v811, %v810
    %813 = vrot.lane.b32.xlu0 %v208, 40
    %v814 = vpop.permute.xlu0 %813
    %v817 = vsel %vm264, %v812, 0
    %819 = vmatprep.subr.bf16.mxu0 0
    %820 = vmatpush1.bf16.msra.mxu0 %v814
    %821 = vmatprep.subr.bf16.mxu0 0
    %822 = vmatpush1.bf16.msra.mxu0 0
    %823 = vmatprep.subr.bf16.mxu0 0
    %824 = vmatpush1.bf16.msra.mxu0 0
    %825 = vmatprep.subr.bf16.mxu0 0
    %826 = vmatpush1.bf16.msra.mxu0 0
    %827 = vmatprep.subr.bf16.mxu0 0
    %828 = vmatpush1.bf16.msra.mxu0 0
    %829 = vmatprep.subr.bf16.mxu0 0
    %830 = vmatpush1.bf16.msra.mxu0 0
    %831 = vmatprep.subr.bf16.mxu0 0
    %832 = vmatpush1.bf16.msra.mxu0 0
    %833 = vmatprep.subr.bf16.mxu0 0
    %834 = vmatpush1.bf16.msra.mxu0 0
    %835 = vmatprep.subr.bf16.mxu0 0
    %836 = vmatpush1.bf16.msra.mxu0 0
    %837 = vmatprep.subr.bf16.mxu0 0
    %838 = vmatpush1.bf16.msra.mxu0 0
    %839 = vmatprep.subr.bf16.mxu0 0
    %840 = vmatpush1.bf16.msra.mxu0 0
    %841 = vmatprep.subr.bf16.mxu0 0
    %842 = vmatpush1.bf16.msra.mxu0 0
    %843 = vmatprep.subr.bf16.mxu0 0
    %844 = vmatpush1.bf16.msra.mxu0 0
    %845 = vmatprep.subr.bf16.mxu0 0
    %846 = vmatpush1.bf16.msra.mxu0 0
    %847 = vmatprep.subr.bf16.mxu0 0
    %848 = vmatpush1.bf16.msra.mxu0 0
    %849 = vmatprep.subr.bf16.mxu0 0
    %850 = vmatpush1.bf16.msra.mxu0 0
    %851 = vmatprep.mubr.bf16.mxu0 0
    %852 = vmatmul.mubr.bf16.gmra.mrb[0].mxu0 %v817
    %v853 = vpop.f32.mrb[0].mxu0
    %v854 = vadd.f32 0.0, %v853
    %v855 = vpop.f32.mrb[0].mxu0
    %v856 = vpop.f32.mrb[0].mxu0
    %v857 = vadd.f32 0.0, %v856
    %v858 = vpop.f32.mrb[0].mxu0
    %859 = vdwg.mxu0
    %v860 = vpack.c.bf16 %v857, %v854
    %v861 = vld [vmem:[#allocation10 + $0x20] sm:$0xf]
    %v863 = vsel %vm212, %v860, 0
    %v866 = vsel %vm467, %v861, 0
    %868 = vmatprep.subr.bf16.mxu0 0
    %869 = vmatpush1.bf16.msra.mxu0 %v866
    %870 = vmatprep.subr.bf16.mxu0 0
    %871 = vmatpush1.bf16.msra.mxu0 0
    %872 = vmatprep.subr.bf16.mxu0 0
    %873 = vmatpush1.bf16.msra.mxu0 0
    %874 = vmatprep.subr.bf16.mxu0 0
    %875 = vmatpush1.bf16.msra.mxu0 0
    %876 = vmatprep.subr.bf16.mxu0 0
    %877 = vmatpush1.bf16.msra.mxu0 0
    %878 = vmatprep.subr.bf16.mxu0 0
    %879 = vmatpush1.bf16.msra.mxu0 0
    %880 = vmatprep.subr.bf16.mxu0 0
    %881 = vmatpush1.bf16.msra.mxu0 0
    %882 = vmatprep.subr.bf16.mxu0 0
    %883 = vmatpush1.bf16.msra.mxu0 0
    %884 = vmatprep.subr.bf16.mxu0 0
    %885 = vmatpush1.bf16.msra.mxu0 0
    %886 = vmatprep.subr.bf16.mxu0 0
    %887 = vmatpush1.bf16.msra.mxu0 0
    %888 = vmatprep.subr.bf16.mxu0 0
    %889 = vmatpush1.bf16.msra.mxu0 0
    %890 = vmatprep.subr.bf16.mxu0 0
    %891 = vmatpush1.bf16.msra.mxu0 0
    %892 = vmatprep.subr.bf16.mxu0 0
    %893 = vmatpush1.bf16.msra.mxu0 0
    %894 = vmatprep.subr.bf16.mxu0 0
    %895 = vmatpush1.bf16.msra.mxu0 0
    %896 = vmatprep.subr.bf16.mxu0 0
    %897 = vmatpush1.bf16.msra.mxu0 0
    %898 = vmatprep.subr.bf16.mxu0 0
    %899 = vmatpush1.bf16.msra.mxu0 0
    %900 = vmatprep.mubr.bf16.mxu0 0
    %901 = vmatmul.mubr.bf16.gmra.mrb[0].mxu0 %v863
    %v902 = vpop.f32.mrb[0].mxu0
    %v903 = vadd.f32 0.0, %v902
    %v904 = vpop.f32.mrb[0].mxu0
    %v905 = vpop.f32.mrb[0].mxu0
    %v906 = vadd.f32 0.0, %v905
    %v907 = vpop.f32.mrb[0].mxu0
    %908 = vdwg.mxu0
    %v909 = vadd.f32 %v733, %v903
    %v910 = vadd.f32 %v734, %v906
    %v911 = vld [vmem:[#allocation10 + $0x24] sm:$0x1]
    %v912 = vunpack.c.l.bf16 %v911
    %v913 = vlaneseq
    %v914 = vshrl.u32 %v913, 7
    %v915 = vsub.s32 0, %v914
    %v916 = vrot.slane %v912, %v915
    %v917 = vadd.f32 %v909, %v916
    %v918 = vadd.f32 %v910, %v916
    %v919 = vadd.f32 %v93, %v917
    %v920 = vadd.f32 %v94, %v918
    %v921 = vsel %vm97, %v919, 0.0
    %922 = vadd.xlane.f32.xlu0 %v921
    %v923 = vpop.xlane.xlu0 %922
    %v924 = vsel %vm97, %v920, 0.0
    %925 = vadd.xlane.f32.xlu0 %v924
    %v926 = vpop.xlane.xlu0 %925
    %v927 = vmul.f32 %v923, %v104
    %v928 = vmul.f32 %v926, %v104
    %v929 = vsub.f32 %v919, %v927
    %v930 = vsub.f32 %v920, %v928
    %v931 = vmul.f32 %v929, %v929
    %v932 = vmul.f32 %v930, %v930
    %v933 = vsel %vm97, %v931, 0.0
    %934 = vadd.xlane.f32.xlu0 %v933
    %v935 = vpop.xlane.xlu0 %934
    %v936 = vsel %vm97, %v932, 0.0
    %937 = vadd.xlane.f32.xlu0 %v936
    %v938 = vpop.xlane.xlu0 %937
    %v939 = vmul.f32 %v935, %v104
    %v940 = vmul.f32 %v938, %v104
    %v941 = vadd.f32 %v939, 1e-05
    %v942 = vadd.f32 %v940, 1e-05
    %v943 = vrsqrt.pop %v941
    %v944 = vrsqrt.pop %v942
    %v945 = vmul.f32 %v929, %v943
    %v946 = vmul.f32 %v930, %v944
    %v947 = vld [vmem:[%s4 + $0x2] sm:$0x1]
    %v948 = vlaneseq
    %v949 = vshrl.u32 %v948, 7
    %v950 = vsub.s32 0, %v949
    %v951 = vrot.slane %v947, %v950
    %v952 = vmul.f32 %v945, %v951
    %v953 = vmul.f32 %v946, %v951
    %v954 = vld [vmem:[%s4 + $0x3] sm:$0x1]
    %v955 = vlaneseq
    %v956 = vshrl.u32 %v955, 7
    %v957 = vsub.s32 0, %v956
    %v958 = vrot.slane %v954, %v957
    %v959 = vadd.f32 %v952, %v958
    %v960 = vadd.f32 %v953, %v958
    %v961 = vld [vmem:[#allocation10 + $0x28] sm:$0xf]
    %v962 = vld [vmem:[#allocation10 + $0x2c] sm:$0xf]
    %v963 = vld [vmem:[#allocation10 + $0x30] sm:$0xf]
    %v964 = vld [vmem:[#allocation10 + $0x34] sm:$0xf]
    %v965 = vld [vmem:[#allocation10 + $0x38] sm:$0x1]
    %v966 = vpack.c.bf16 %v960, %v959
    %v967 = vunpack.c.l.bf16 %v965
    %v968 = vlaneseq
    %v969 = vshrl.u32 %v968, 7
    %v970 = vsub.s32 0, %v969
    %v971 = vrot.slane %v967, %v970
    %v976 = vunpack.c.l.b16 %v961
    %v977 = vunpack.c.l.b16 %v962
    %v978 = vunpack.c.l.b16 %v963
    %v979 = vunpack.c.l.b16 %v964
    %v980 = vpack.c.b16 %v977, %v976
    %v981 = vpack.c.b16 %v979, %v978
    %v985 = vsel %vm97, %v966, 0
    %987 = vmatprep.subr.bf16.mxu0 0
    %988 = vmatpush1.bf16.msra.mxu0 %v980
    %989 = vmatprep.subr.bf16.mxu0 0
    %990 = vmatpush1.bf16.msra.mxu0 %v981
    %991 = vmatprep.subr.bf16.mxu0 0
    %992 = vmatpush1.bf16.msra.mxu0 0
    %993 = vmatprep.subr.bf16.mxu0 0
    %994 = vmatpush1.bf16.msra.mxu0 0
    %995 = vmatprep.subr.bf16.mxu0 0
    %996 = vmatpush1.bf16.msra.mxu0 0
    %997 = vmatprep.subr.bf16.mxu0 0
    %998 = vmatpush1.bf16.msra.mxu0 0
    %999 = vmatprep.subr.bf16.mxu0 0
    %1000 = vmatpush1.bf16.msra.mxu0 0
    %1001 = vmatprep.subr.bf16.mxu0 0
    %1002 = vmatpush1.bf16.msra.mxu0 0
    %1003 = vmatprep.subr.bf16.mxu0 0
    %1004 = vmatpush1.bf16.msra.mxu0 0
    %1005 = vmatprep.subr.bf16.mxu0 0
    %1006 = vmatpush1.bf16.msra.mxu0 0
    %1007 = vmatprep.subr.bf16.mxu0 0
    %1008 = vmatpush1.bf16.msra.mxu0 0
    %1009 = vmatprep.subr.bf16.mxu0 0
    %1010 = vmatpush1.bf16.msra.mxu0 0
    %1011 = vmatprep.subr.bf16.mxu0 0
    %1012 = vmatpush1.bf16.msra.mxu0 0
    %1013 = vmatprep.subr.bf16.mxu0 0
    %1014 = vmatpush1.bf16.msra.mxu0 0
    %1015 = vmatprep.subr.bf16.mxu0 0
    %1016 = vmatpush1.bf16.msra.mxu0 0
    %1017 = vmatprep.subr.bf16.mxu0 0
    %1018 = vmatpush1.bf16.msra.mxu0 0
    %1019 = vmatprep.mubr.bf16.mxu0 0
    %1020 = vmatmul.mubr.bf16.gmra.mrb[0].mxu0 %v985
    %v1021 = vpop.f32.mrb[0].mxu0
    %v1022 = vadd.f32 %v971, %v1021
    %v1023 = vpop.f32.mrb[0].mxu0
    %v1024 = vpop.f32.mrb[0].mxu0
    %v1025 = vadd.f32 %v971, %v1024
    %v1026 = vpop.f32.mrb[0].mxu0
    %1027 = vdwg.mxu0
    %v1028 = vld [vmem:[#allocation10 + $0x3c] sm:$0xf]
    %v1029 = vld [vmem:[#allocation10 + $0x40] sm:$0xf]
    %v1030 = vld [vmem:[#allocation10 + $0x44] sm:$0xf]
    %v1031 = vld [vmem:[#allocation10 + $0x48] sm:$0xf]
    %v1032 = vld [vmem:[#allocation10 + $0x4c] sm:$0x1]
    %v1033 = vpack.c.bf16 %v96, %v95
    %v1034 = vunpack.c.l.bf16 %v1032
    %v1035 = vlaneseq
    %v1036 = vshrl.u32 %v1035, 7
    %v1037 = vsub.s32 0, %v1036
    %v1038 = vrot.slane %v1034, %v1037
    %v1043 = vunpack.c.l.b16 %v1028
    %v1044 = vunpack.c.l.b16 %v1029
    %v1045 = vunpack.c.l.b16 %v1030
    %v1046 = vunpack.c.l.b16 %v1031
    %v1047 = vpack.c.b16 %v1044, %v1043
    %v1048 = vpack.c.b16 %v1046, %v1045
    %v1052 = vsel %vm97, %v1033, 0
    %1054 = vmatprep.subr.bf16.mxu0 0
    %1055 = vmatpush1.bf16.msra.mxu0 %v1047
    %1056 = vmatprep.subr.bf16.mxu0 0
    %1057 = vmatpush1.bf16.msra.mxu0 %v1048
    %1058 = vmatprep.subr.bf16.mxu0 0
    %1059 = vmatpush1.bf16.msra.mxu0 0
    %1060 = vmatprep.subr.bf16.mxu0 0
    %1061 = vmatpush1.bf16.msra.mxu0 0
    %1062 = vmatprep.subr.bf16.mxu0 0
    %1063 = vmatpush1.bf16.msra.mxu0 0
    %1064 = vmatprep.subr.bf16.mxu0 0
    %1065 = vmatpush1.bf16.msra.mxu0 0
    %1066 = vmatprep.subr.bf16.mxu0 0
    %1067 = vmatpush1.bf16.msra.mxu0 0
    %1068 = vmatprep.subr.bf16.mxu0 0
    %1069 = vmatpush1.bf16.msra.mxu0 0
    %1070 = vmatprep.subr.bf16.mxu0 0
    %1071 = vmatpush1.bf16.msra.mxu0 0
    %1072 = vmatprep.subr.bf16.mxu0 0
    %1073 = vmatpush1.bf16.msra.mxu0 0
    %1074 = vmatprep.subr.bf16.mxu0 0
    %1075 = vmatpush1.bf16.msra.mxu0 0
    %1076 = vmatprep.subr.bf16.mxu0 0
    %1077 = vmatpush1.bf16.msra.mxu0 0
    %1078 = vmatprep.subr.bf16.mxu0 0
    %1079 = vmatpush1.bf16.msra.mxu0 0
    %1080 = vmatprep.subr.bf16.mxu0 0
    %1081 = vmatpush1.bf16.msra.mxu0 0
    %1082 = vmatprep.subr.bf16.mxu0 0
    %1083 = vmatpush1.bf16.msra.mxu0 0
    %1084 = vmatprep.subr.bf16.mxu0 0
    %1085 = vmatpush1.bf16.msra.mxu0 0
    %1086 = vmatprep.mubr.bf16.mxu0 0
    %1087 = vmatmul.mubr.bf16.gmra.mrb[0].mxu0 %v1052
    %v1088 = vpop.f32.mrb[0].mxu0
    %v1089 = vadd.f32 %v1038, %v1088
    %v1090 = vpop.f32.mrb[0].mxu0
    %v1091 = vpop.f32.mrb[0].mxu0
    %v1092 = vadd.f32 %v1038, %v1091
    %v1093 = vpop.f32.mrb[0].mxu0
    %1094 = vdwg.mxu0
    %v1095 = vld [vmem:[#allocation8] sm:$0xff]
    %v1096 = vld [vmem:[#allocation8 + $0x8] sm:$0xff]
    %v1097 = vpack.c.bf16 %v1025, %v1022
    %v1098 = vpack.c.bf16 %v1092, %v1089
    %v1100 = vsel %vm212, %v1097, 0
    %v1103 = vsel %vm212, %v1098, 0
    %1105 = vmatprep.subr.bf16.mxu0 0
    %1106 = vmatpush1.bf16.xpose.msra.mxu0 %v1103
    %1107 = vmatprep.subr.bf16.mxu0 0
    %1108 = vmatpush1.bf16.xpose.msra.mxu0 0
    %1109 = vmatprep.subr.bf16.mxu0 0
    %1110 = vmatpush1.bf16.xpose.msra.mxu0 0
    %1111 = vmatprep.subr.bf16.mxu0 0
    %1112 = vmatpush1.bf16.xpose.msra.mxu0 0
    %1113 = vmatprep.subr.bf16.mxu0 0
    %1114 = vmatpush1.bf16.xpose.msra.mxu0 0
    %1115 = vmatprep.subr.bf16.mxu0 0
    %1116 = vmatpush1.bf16.xpose.msra.mxu0 0
    %1117 = vmatprep.subr.bf16.mxu0 0
    %1118 = vmatpush1.bf16.xpose.msra.mxu0 0
    %1119 = vmatprep.subr.bf16.mxu0 0
    %1120 = vmatpush1.bf16.xpose.msra.mxu0 0
    %1121 = vmatprep.subr.bf16.mxu0 0
    %1122 = vmatpush1.bf16.xpose.msra.mxu0 0
    %1123 = vmatprep.subr.bf16.mxu0 0
    %1124 = vmatpush1.bf16.xpose.msra.mxu0 0
    %1125 = vmatprep.subr.bf16.mxu0 0
    %1126 = vmatpush1.bf16.xpose.msra.mxu0 0
    %1127 = vmatprep.subr.bf16.mxu0 0
    %1128 = vmatpush1.bf16.xpose.msra.mxu0 0
    %1129 = vmatprep.subr.bf16.mxu0 0
    %1130 = vmatpush1.bf16.xpose.msra.mxu0 0
    %1131 = vmatprep.subr.bf16.mxu0 0
    %1132 = vmatpush1.bf16.xpose.msra.mxu0 0
    %1133 = vmatprep.subr.bf16.mxu0 0
    %1134 = vmatpush1.bf16.xpose.msra.mxu0 0
    %1135 = vmatprep.subr.bf16.mxu0 0
    %1136 = vmatpush1.bf16.xpose.msra.mxu0 0
    %1137 = vmatprep.mubr.bf16.mxu0 0
    %1138 = vmatmul.mubr.bf16.gmra.mrb[0].mxu0 %v1100
    %v1139 = vpop.f32.mrb[0].mxu0
    %v1140 = vadd.f32 0.0, %v1139
    %v1141 = vpop.f32.mrb[0].mxu0
    %v1142 = vpop.f32.mrb[0].mxu0
    %v1143 = vadd.f32 0.0, %v1142
    %v1144 = vpop.f32.mrb[0].mxu0
    %1145 = vdwg.mxu0
    %v1146 = vmul.f32 %v1140, 0.35355338
    %v1147 = vmul.f32 %v1143, 0.35355338
    %v1148 = vadd.f32 %v1146, %v1095
    %v1149 = vadd.f32 %v1147, %v1096
    %v1150 = vsel %vm264, %v1148, -inf
    %1151 = vmax.xlane.f32.xlu0 %v1150
    %v1152 = vpop.xlane.xlu0 %1151
    %v1153 = vsel %vm264, %v1149, -inf
    %1154 = vmax.xlane.f32.xlu0 %v1153
    %v1155 = vpop.xlane.xlu0 %1154
    %v1156 = vsub.f32 %v1148, %v1152
    %v1157 = vsub.f32 %v1149, %v1155
    %v1158 = vmul.f32 %v1156, 1.442695
    %v1159 = vpow.pop %v1158
    %v1160 = vmul.f32 %v1157, 1.442695
    %v1161 = vpow.pop %v1160
    %v1162 = vsel %vm264, %v1159, 0.0
    %1163 = vadd.xlane.f32.xlu0 %v1162
    %v1164 = vpop.xlane.xlu0 %1163
    %v1165 = vsel %vm264, %v1161, 0.0
    %1166 = vadd.xlane.f32.xlu0 %v1165
    %v1167 = vpop.xlane.xlu0 %1166
    %v1168 = vrcp.pop %v1164
    %v1169 = vrcp.pop %v1167
    %v1170 = vmul.f32 %v1159, %v1168
    %v1171 = vmul.f32 %v1161, %v1169
    %v1172 = vpack.c.bf16 %v1171, %v1170
    %1174 = vrot.lane.b32.xlu0 %v1098, 96
    %v1175 = vpop.permute.xlu0 %1174
    %v1178 = vsel %vm264, %v1172, 0
    %1180 = vmatprep.subr.bf16.mxu0 0
    %1181 = vmatpush1.bf16.msra.mxu0 %v1175
    %1182 = vmatprep.subr.bf16.mxu0 0
    %1183 = vmatpush1.bf16.msra.mxu0 0
    %1184 = vmatprep.subr.bf16.mxu0 0
    %1185 = vmatpush1.bf16.msra.mxu0 0
    %1186 = vmatprep.subr.bf16.mxu0 0
    %1187 = vmatpush1.bf16.msra.mxu0 0
    %1188 = vmatprep.subr.bf16.mxu0 0
    %1189 = vmatpush1.bf16.msra.mxu0 0
    %1190 = vmatprep.subr.bf16.mxu0 0
    %1191 = vmatpush1.bf16.msra.mxu0 0
    %1192 = vmatprep.subr.bf16.mxu0 0
    %1193 = vmatpush1.bf16.msra.mxu0 0
    %1194 = vmatprep.subr.bf16.mxu0 0
    %1195 = vmatpush1.bf16.msra.mxu0 0
    %1196 = vmatprep.subr.bf16.mxu0 0
    %1197 = vmatpush1.bf16.msra.mxu0 0
    %1198 = vmatprep.subr.bf16.mxu0 0
    %1199 = vmatpush1.bf16.msra.mxu0 0
    %1200 = vmatprep.subr.bf16.mxu0 0
    %1201 = vmatpush1.bf16.msra.mxu0 0
    %1202 = vmatprep.subr.bf16.mxu0 0
    %1203 = vmatpush1.bf16.msra.mxu0 0
    %1204 = vmatprep.subr.bf16.mxu0 0
    %1205 = vmatpush1.bf16.msra.mxu0 0
    %1206 = vmatprep.subr.bf16.mxu0 0
    %1207 = vmatpush1.bf16.msra.mxu0 0
    %1208 = vmatprep.subr.bf16.mxu0 0
    %1209 = vmatpush1.bf16.msra.mxu0 0
    %1210 = vmatprep.subr.bf16.mxu0 0
    %1211 = vmatpush1.bf16.msra.mxu0 0
    %1212 = vmatprep.mubr.bf16.mxu0 0
    %1213 = vmatmul.mubr.bf16.gmra.mrb[0].mxu0 %v1178
    %v1214 = vpop.f32.mrb[0].mxu0
    %v1215 = vadd.f32 0.0, %v1214
    %v1216 = vpop.f32.mrb[0].mxu0
    %v1217 = vpop.f32.mrb[0].mxu0
    %v1218 = vadd.f32 0.0, %v1217
    %v1219 = vpop.f32.mrb[0].mxu0
    %1220 = vdwg.mxu0
    %v1221 = vpack.c.bf16 %v1218, %v1215
    %v1222 = vld [vmem:[#allocation10 + $0x50] sm:$0xf]
    %1224 = vrot.lane.b32.xlu0 %v1097, 120
    %v1225 = vpop.permute.xlu0 %1224
    %1226 = vrot.lane.b32.xlu0 %v1098, 120
    %v1227 = vpop.permute.xlu0 %1226
    %v1229 = vsel %vm212, %v1225, 0
    %v1232 = vsel %vm212, %v1227, 0
    %1234 = vmatprep.subr.bf16.mxu0 0
    %1235 = vmatpush1.bf16.xpose.msra.mxu0 %v1232
    %1236 = vmatprep.subr.bf16.mxu0 0
    %1237 = vmatpush1.bf16.xpose.msra.mxu0 0
    %1238 = vmatprep.subr.bf16.mxu0 0
    %1239 = vmatpush1.bf16.xpose.msra.mxu0 0
    %1240 = vmatprep.subr.bf16.mxu0 0
    %1241 = vmatpush1.bf16.xpose.msra.mxu0 0
    %1242 = vmatprep.subr.bf16.mxu0 0
    %1243 = vmatpush1.bf16.xpose.msra.mxu0 0
    %1244 = vmatprep.subr.bf16.mxu0 0
    %1245 = vmatpush1.bf16.xpose.msra.mxu0 0
    %1246 = vmatprep.subr.bf16.mxu0 0
    %1247 = vmatpush1.bf16.xpose.msra.mxu0 0
    %1248 = vmatprep.subr.bf16.mxu0 0
    %1249 = vmatpush1.bf16.xpose.msra.mxu0 0
    %1250 = vmatprep.subr.bf16.mxu0 0
    %1251 = vmatpush1.bf16.xpose.msra.mxu0 0
    %1252 = vmatprep.subr.bf16.mxu0 0
    %1253 = vmatpush1.bf16.xpose.msra.mxu0 0
    %1254 = vmatprep.subr.bf16.mxu0 0
    %1255 = vmatpush1.bf16.xpose.msra.mxu0 0
    %1256 = vmatprep.subr.bf16.mxu0 0
    %1257 = vmatpush1.bf16.xpose.msra.mxu0 0
    %1258 = vmatprep.subr.bf16.mxu0 0
    %1259 = vmatpush1.bf16.xpose.msra.mxu0 0
    %1260 = vmatprep.subr.bf16.mxu0 0
    %1261 = vmatpush1.bf16.xpose.msra.mxu0 0
    %1262 = vmatprep.subr.bf16.mxu0 0
    %1263 = vmatpush1.bf16.xpose.msra.mxu0 0
    %1264 = vmatprep.subr.bf16.mxu0 0
    %1265 = vmatpush1.bf16.xpose.msra.mxu0 0
    %1266 = vmatprep.mubr.bf16.mxu0 0
    %1267 = vmatmul.mubr.bf16.gmra.mrb[0].mxu0 %v1229
    %v1268 = vpop.f32.mrb[0].mxu0
    %v1269 = vadd.f32 0.0, %v1268
    %v1270 = vpop.f32.mrb[0].mxu0
    %v1271 = vpop.f32.mrb[0].mxu0
    %v1272 = vadd.f32 0.0, %v1271
    %v1273 = vpop.f32.mrb[0].mxu0
    %1274 = vdwg.mxu0
    %v1275 = vmul.f32 %v1269, 0.35355338
    %v1276 = vmul.f32 %v1272, 0.35355338
    %v1277 = vadd.f32 %v1275, %v1095
    %v1278 = vadd.f32 %v1276, %v1096
    %v1279 = vsel %vm264, %v1277, -inf
    %1280 = vmax.xlane.f32.xlu0 %v1279
    %v1281 = vpop.xlane.xlu0 %1280
    %v1282 = vsel %vm264, %v1278, -inf
    %1283 = vmax.xlane.f32.xlu0 %v1282
    %v1284 = vpop.xlane.xlu0 %1283
    %v1285 = vsub.f32 %v1277, %v1281
    %v1286 = vsub.f32 %v1278, %v1284
    %v1287 = vmul.f32 %v1285, 1.442695
    %v1288 = vpow.pop %v1287
    %v1289 = vmul.f32 %v1286, 1.442695
    %v1290 = vpow.pop %v1289
    %v1291 = vsel %vm264, %v1288, 0.0
    %1292 = vadd.xlane.f32.xlu0 %v1291
    %v1293 = vpop.xlane.xlu0 %1292
    %v1294 = vsel %vm264, %v1290, 0.0
    %1295 = vadd.xlane.f32.xlu0 %v1294
    %v1296 = vpop.xlane.xlu0 %1295
    %v1297 = vrcp.pop %v1293
    %v1298 = vrcp.pop %v1296
    %v1299 = vmul.f32 %v1288, %v1297
    %v1300 = vmul.f32 %v1290, %v1298
    %v1301 = vpack.c.bf16 %v1300, %v1299
    %1302 = vrot.lane.b32.xlu0 %v1098, 88
    %v1303 = vpop.permute.xlu0 %1302
    %v1306 = vsel %vm264, %v1301, 0
    %1308 = vmatprep.subr.bf16.mxu0 0
    %1309 = vmatpush1.bf16.msra.mxu0 %v1303
    %1310 = vmatprep.subr.bf16.mxu0 0
    %1311 = vmatpush1.bf16.msra.mxu0 0
    %1312 = vmatprep.subr.bf16.mxu0 0
    %1313 = vmatpush1.bf16.msra.mxu0 0
    %1314 = vmatprep.subr.bf16.mxu0 0
    %1315 = vmatpush1.bf16.msra.mxu0 0
    %1316 = vmatprep.subr.bf16.mxu0 0
    %1317 = vmatpush1.bf16.msra.mxu0 0
    %1318 = vmatprep.subr.bf16.mxu0 0
    %1319 = vmatpush1.bf16.msra.mxu0 0
    %1320 = vmatprep.subr.bf16.mxu0 0
    %1321 = vmatpush1.bf16.msra.mxu0 0
    %1322 = vmatprep.subr.bf16.mxu0 0
    %1323 = vmatpush1.bf16.msra.mxu0 0
    %1324 = vmatprep.subr.bf16.mxu0 0
    %1325 = vmatpush1.bf16.msra.mxu0 0
    %1326 = vmatprep.subr.bf16.mxu0 0
    %1327 = vmatpush1.bf16.msra.mxu0 0
    %1328 = vmatprep.subr.bf16.mxu0 0
    %1329 = vmatpush1.bf16.msra.mxu0 0
    %1330 = vmatprep.subr.bf16.mxu0 0
    %1331 = vmatpush1.bf16.msra.mxu0 0
    %1332 = vmatprep.subr.bf16.mxu0 0
    %1333 = vmatpush1.bf16.msra.mxu0 0
    %1334 = vmatprep.subr.bf16.mxu0 0
    %1335 = vmatpush1.bf16.msra.mxu0 0
    %1336 = vmatprep.subr.bf16.mxu0 0
    %1337 = vmatpush1.bf16.msra.mxu0 0
    %1338 = vmatprep.subr.bf16.mxu0 0
    %1339 = vmatpush1.bf16.msra.mxu0 0
    %1340 = vmatprep.mubr.bf16.mxu0 0
    %1341 = vmatmul.mubr.bf16.gmra.mrb[0].mxu0 %v1306
    %v1342 = vpop.f32.mrb[0].mxu0
    %v1343 = vadd.f32 0.0, %v1342
    %v1344 = vpop.f32.mrb[0].mxu0
    %v1345 = vpop.f32.mrb[0].mxu0
    %v1346 = vadd.f32 0.0, %v1345
    %v1347 = vpop.f32.mrb[0].mxu0
    %1348 = vdwg.mxu0
    %v1349 = vpack.c.bf16 %v1346, %v1343
    %v1350 = vld [vmem:[#allocation10 + $0x54] sm:$0xf]
    %v1352 = vsel %vm212, %v1349, 0
    %v1355 = vsel %vm467, %v1350, 0
    %1357 = vmatprep.subr.bf16.mxu0 0
    %1358 = vmatpush1.bf16.msra.mxu0 %v1355
    %1359 = vmatprep.subr.bf16.mxu0 0
    %1360 = vmatpush1.bf16.msra.mxu0 0
    %1361 = vmatprep.subr.bf16.mxu0 0
    %1362 = vmatpush1.bf16.msra.mxu0 0
    %1363 = vmatprep.subr.bf16.mxu0 0
    %1364 = vmatpush1.bf16.msra.mxu0 0
    %1365 = vmatprep.subr.bf16.mxu0 0
    %1366 = vmatpush1.bf16.msra.mxu0 0
    %1367 = vmatprep.subr.bf16.mxu0 0
    %1368 = vmatpush1.bf16.msra.mxu0 0
    %1369 = vmatprep.subr.bf16.mxu0 0
    %1370 = vmatpush1.bf16.msra.mxu0 0
    %1371 = vmatprep.subr.bf16.mxu0 0
    %1372 = vmatpush1.bf16.msra.mxu0 0
    %1373 = vmatprep.subr.bf16.mxu0 0
    %1374 = vmatpush1.bf16.msra.mxu0 0
    %1375 = vmatprep.subr.bf16.mxu0 0
    %1376 = vmatpush1.bf16.msra.mxu0 0
    %1377 = vmatprep.subr.bf16.mxu0 0
    %1378 = vmatpush1.bf16.msra.mxu0 0
    %1379 = vmatprep.subr.bf16.mxu0 0
    %1380 = vmatpush1.bf16.msra.mxu0 0
    %1381 = vmatprep.subr.bf16.mxu0 0
    %1382 = vmatpush1.bf16.msra.mxu0 0
    %1383 = vmatprep.subr.bf16.mxu0 0
    %1384 = vmatpush1.bf16.msra.mxu0 0
    %1385 = vmatprep.subr.bf16.mxu0 0
    %1386 = vmatpush1.bf16.msra.mxu0 0
    %1387 = vmatprep.subr.bf16.mxu0 0
    %1388 = vmatpush1.bf16.msra.mxu0 0
    %1389 = vmatprep.mubr.bf16.mxu0 0
    %1390 = vmatmul.mubr.bf16.gmra.mrb[0].mxu0 %v1352
    %v1391 = vpop.f32.mrb[0].mxu0
    %v1392 = vadd.f32 0.0, %v1391
    %v1393 = vpop.f32.mrb[0].mxu0
    %v1394 = vpop.f32.mrb[0].mxu0
    %v1395 = vadd.f32 0.0, %v1394
    %v1396 = vpop.f32.mrb[0].mxu0
    %1397 = vdwg.mxu0
    %v1399 = vsel %vm212, %v1221, 0
    %v1402 = vsel %vm467, %v1222, 0
    %1404 = vmatprep.subr.bf16.mxu0 0
    %1405 = vmatpush1.bf16.msra.mxu0 %v1402
    %1406 = vmatprep.subr.bf16.mxu0 0
    %1407 = vmatpush1.bf16.msra.mxu0 0
    %1408 = vmatprep.subr.bf16.mxu0 0
    %1409 = vmatpush1.bf16.msra.mxu0 0
    %1410 = vmatprep.subr.bf16.mxu0 0
    %1411 = vmatpush1.bf16.msra.mxu0 0
    %1412 = vmatprep.subr.bf16.mxu0 0
    %1413 = vmatpush1.bf16.msra.mxu0 0
    %1414 = vmatprep.subr.bf16.mxu0 0
    %1415 = vmatpush1.bf16.msra.mxu0 0
    %1416 = vmatprep.subr.bf16.mxu0 0
    %1417 = vmatpush1.bf16.msra.mxu0 0
    %1418 = vmatprep.subr.bf16.mxu0 0
    %1419 = vmatpush1.bf16.msra.mxu0 0
    %1420 = vmatprep.subr.bf16.mxu0 0
    %1421 = vmatpush1.bf16.msra.mxu0 0
    %1422 = vmatprep.subr.bf16.mxu0 0
    %1423 = vmatpush1.bf16.msra.mxu0 0
    %1424 = vmatprep.subr.bf16.mxu0 0
    %1425 = vmatpush1.bf16.msra.mxu0 0
    %1426 = vmatprep.subr.bf16.mxu0 0
    %1427 = vmatpush1.bf16.msra.mxu0 0
    %1428 = vmatprep.subr.bf16.mxu0 0
    %1429 = vmatpush1.bf16.msra.mxu0 0
    %1430 = vmatprep.subr.bf16.mxu0 0
    %1431 = vmatpush1.bf16.msra.mxu0 0
    %1432 = vmatprep.subr.bf16.mxu0 0
    %1433 = vmatpush1.bf16.msra.mxu0 0
    %1434 = vmatprep.subr.bf16.mxu0 0
    %1435 = vmatpush1.bf16.msra.mxu0 0
    %1436 = vmatprep.mubr.bf16.mxu0 0
    %1437 = vmatmul.mubr.bf16.gmra.mrb[0].mxu0 %v1399
    %v1438 = vpop.f32.mrb[0].mxu0
    %v1439 = vadd.f32 %v1392, %v1438
    %v1440 = vpop.f32.mrb[0].mxu0
    %v1441 = vpop.f32.mrb[0].mxu0
    %v1442 = vadd.f32 %v1395, %v1441
    %v1443 = vpop.f32.mrb[0].mxu0
    %1444 = vdwg.mxu0
    %1445 = vrot.lane.b32.xlu0 %v1097, 112
    %v1446 = vpop.permute.xlu0 %1445
    %1447 = vrot.lane.b32.xlu0 %v1098, 112
    %v1448 = vpop.permute.xlu0 %1447
    %v1450 = vsel %vm212, %v1446, 0
    %v1453 = vsel %vm212, %v1448, 0
    %1455 = vmatprep.subr.bf16.mxu0 0
    %1456 = vmatpush1.bf16.xpose.msra.mxu0 %v1453
    %1457 = vmatprep.subr.bf16.mxu0 0
    %1458 = vmatpush1.bf16.xpose.msra.mxu0 0
    %1459 = vmatprep.subr.bf16.mxu0 0
    %1460 = vmatpush1.bf16.xpose.msra.mxu0 0
    %1461 = vmatprep.subr.bf16.mxu0 0
    %1462 = vmatpush1.bf16.xpose.msra.mxu0 0
    %1463 = vmatprep.subr.bf16.mxu0 0
    %1464 = vmatpush1.bf16.xpose.msra.mxu0 0
    %1465 = vmatprep.subr.bf16.mxu0 0
    %1466 = vmatpush1.bf16.xpose.msra.mxu0 0
    %1467 = vmatprep.subr.bf16.mxu0 0
    %1468 = vmatpush1.bf16.xpose.msra.mxu0 0
    %1469 = vmatprep.subr.bf16.mxu0 0
    %1470 = vmatpush1.bf16.xpose.msra.mxu0 0
    %1471 = vmatprep.subr.bf16.mxu0 0
    %1472 = vmatpush1.bf16.xpose.msra.mxu0 0
    %1473 = vmatprep.subr.bf16.mxu0 0
    %1474 = vmatpush1.bf16.xpose.msra.mxu0 0
    %1475 = vmatprep.subr.bf16.mxu0 0
    %1476 = vmatpush1.bf16.xpose.msra.mxu0 0
    %1477 = vmatprep.subr.bf16.mxu0 0
    %1478 = vmatpush1.bf16.xpose.msra.mxu0 0
    %1479 = vmatprep.subr.bf16.mxu0 0
    %1480 = vmatpush1.bf16.xpose.msra.mxu0 0
    %1481 = vmatprep.subr.bf16.mxu0 0
    %1482 = vmatpush1.bf16.xpose.msra.mxu0 0
    %1483 = vmatprep.subr.bf16.mxu0 0
    %1484 = vmatpush1.bf16.xpose.msra.mxu0 0
    %1485 = vmatprep.subr.bf16.mxu0 0
    %1486 = vmatpush1.bf16.xpose.msra.mxu0 0
    %1487 = vmatprep.mubr.bf16.mxu0 0
    %1488 = vmatmul.mubr.bf16.gmra.mrb[0].mxu0 %v1450
    %v1489 = vpop.f32.mrb[0].mxu0
    %v1490 = vadd.f32 0.0, %v1489
    %v1491 = vpop.f32.mrb[0].mxu0
    %v1492 = vpop.f32.mrb[0].mxu0
    %v1493 = vadd.f32 0.0, %v1492
    %v1494 = vpop.f32.mrb[0].mxu0
    %1495 = vdwg.mxu0
    %v1496 = vmul.f32 %v1490, 0.35355338
    %v1497 = vmul.f32 %v1493, 0.35355338
    %v1498 = vadd.f32 %v1496, %v1095
    %v1499 = vadd.f32 %v1497, %v1096
    %v1500 = vsel %vm264, %v1498, -inf
    %1501 = vmax.xlane.f32.xlu0 %v1500
    %v1502 = vpop.xlane.xlu0 %1501
    %v1503 = vsel %vm264, %v1499, -inf
    %1504 = vmax.xlane.f32.xlu0 %v1503
    %v1505 = vpop.xlane.xlu0 %1504
    %v1506 = vsub.f32 %v1498, %v1502
    %v1507 = vsub.f32 %v1499, %v1505
    %v1508 = vmul.f32 %v1506, 1.442695
    %v1509 = vpow.pop %v1508
    %v1510 = vmul.f32 %v1507, 1.442695
    %v1511 = vpow.pop %v1510
    %v1512 = vsel %vm264, %v1509, 0.0
    %1513 = vadd.xlane.f32.xlu0 %v1512
    %v1514 = vpop.xlane.xlu0 %1513
    %v1515 = vsel %vm264, %v1511, 0.0
    %1516 = vadd.xlane.f32.xlu0 %v1515
    %v1517 = vpop.xlane.xlu0 %1516
    %v1518 = vrcp.pop %v1514
    %v1519 = vrcp.pop %v1517
    %v1520 = vmul.f32 %v1509, %v1518
    %v1521 = vmul.f32 %v1511, %v1519
    %v1522 = vpack.c.bf16 %v1521, %v1520
    %1523 = vrot.lane.b32.xlu0 %v1098, 80
    %v1524 = vpop.permute.xlu0 %1523
    %v1527 = vsel %vm264, %v1522, 0
    %1529 = vmatprep.subr.bf16.mxu0 0
    %1530 = vmatpush1.bf16.msra.mxu0 %v1524
    %1531 = vmatprep.subr.bf16.mxu0 0
    %1532 = vmatpush1.bf16.msra.mxu0 0
    %1533 = vmatprep.subr.bf16.mxu0 0
    %1534 = vmatpush1.bf16.msra.mxu0 0
    %1535 = vmatprep.subr.bf16.mxu0 0
    %1536 = vmatpush1.bf16.msra.mxu0 0
    %1537 = vmatprep.subr.bf16.mxu0 0
    %1538 = vmatpush1.bf16.msra.mxu0 0
    %1539 = vmatprep.subr.bf16.mxu0 0
    %1540 = vmatpush1.bf16.msra.mxu0 0
    %1541 = vmatprep.subr.bf16.mxu0 0
    %1542 = vmatpush1.bf16.msra.mxu0 0
    %1543 = vmatprep.subr.bf16.mxu0 0
    %1544 = vmatpush1.bf16.msra.mxu0 0
    %1545 = vmatprep.subr.bf16.mxu0 0
    %1546 = vmatpush1.bf16.msra.mxu0 0
    %1547 = vmatprep.subr.bf16.mxu0 0
    %1548 = vmatpush1.bf16.msra.mxu0 0
    %1549 = vmatprep.subr.bf16.mxu0 0
    %1550 = vmatpush1.bf16.msra.mxu0 0
    %1551 = vmatprep.subr.bf16.mxu0 0
    %1552 = vmatpush1.bf16.msra.mxu0 0
    %1553 = vmatprep.subr.bf16.mxu0 0
    %1554 = vmatpush1.bf16.msra.mxu0 0
    %1555 = vmatprep.subr.bf16.mxu0 0
    %1556 = vmatpush1.bf16.msra.mxu0 0
    %1557 = vmatprep.subr.bf16.mxu0 0
    %1558 = vmatpush1.bf16.msra.mxu0 0
    %1559 = vmatprep.subr.bf16.mxu0 0
    %1560 = vmatpush1.bf16.msra.mxu0 0
    %1561 = vmatprep.mubr.bf16.mxu0 0
    %1562 = vmatmul.mubr.bf16.gmra.mrb[0].mxu0 %v1527
    %v1563 = vpop.f32.mrb[0].mxu0
    %v1564 = vadd.f32 0.0, %v1563
    %v1565 = vpop.f32.mrb[0].mxu0
    %v1566 = vpop.f32.mrb[0].mxu0
    %v1567 = vadd.f32 0.0, %v1566
    %v1568 = vpop.f32.mrb[0].mxu0
    %1569 = vdwg.mxu0
    %v1570 = vpack.c.bf16 %v1567, %v1564
    %v1571 = vld [vmem:[#allocation10 + $0x58] sm:$0xf]
    %v1573 = vsel %vm212, %v1570, 0
    %v1576 = vsel %vm467, %v1571, 0
    %1578 = vmatprep.subr.bf16.mxu0 0
    %1579 = vmatpush1.bf16.msra.mxu0 %v1576
    %1580 = vmatprep.subr.bf16.mxu0 0
    %1581 = vmatpush1.bf16.msra.mxu0 0
    %1582 = vmatprep.subr.bf16.mxu0 0
    %1583 = vmatpush1.bf16.msra.mxu0 0
    %1584 = vmatprep.subr.bf16.mxu0 0
    %1585 = vmatpush1.bf16.msra.mxu0 0
    %1586 = vmatprep.subr.bf16.mxu0 0
    %1587 = vmatpush1.bf16.msra.mxu0 0
    %1588 = vmatprep.subr.bf16.mxu0 0
    %1589 = vmatpush1.bf16.msra.mxu0 0
    %1590 = vmatprep.subr.bf16.mxu0 0
    %1591 = vmatpush1.bf16.msra.mxu0 0
    %1592 = vmatprep.subr.bf16.mxu0 0
    %1593 = vmatpush1.bf16.msra.mxu0 0
    %1594 = vmatprep.subr.bf16.mxu0 0
    %1595 = vmatpush1.bf16.msra.mxu0 0
    %1596 = vmatprep.subr.bf16.mxu0 0
    %1597 = vmatpush1.bf16.msra.mxu0 0
    %1598 = vmatprep.subr.bf16.mxu0 0
    %1599 = vmatpush1.bf16.msra.mxu0 0
    %1600 = vmatprep.subr.bf16.mxu0 0
    %1601 = vmatpush1.bf16.msra.mxu0 0
    %1602 = vmatprep.subr.bf16.mxu0 0
    %1603 = vmatpush1.bf16.msra.mxu0 0
    %1604 = vmatprep.subr.bf16.mxu0 0
    %1605 = vmatpush1.bf16.msra.mxu0 0
    %1606 = vmatprep.subr.bf16.mxu0 0
    %1607 = vmatpush1.bf16.msra.mxu0 0
    %1608 = vmatprep.subr.bf16.mxu0 0
    %1609 = vmatpush1.bf16.msra.mxu0 0
    %1610 = vmatprep.mubr.bf16.mxu0 0
    %1611 = vmatmul.mubr.bf16.gmra.mrb[0].mxu0 %v1573
    %v1612 = vpop.f32.mrb[0].mxu0
    %v1613 = vadd.f32 0.0, %v1612
    %v1614 = vpop.f32.mrb[0].mxu0
    %v1615 = vpop.f32.mrb[0].mxu0
    %v1616 = vadd.f32 0.0, %v1615
    %v1617 = vpop.f32.mrb[0].mxu0
    %1618 = vdwg.mxu0
    %v1619 = vadd.f32 %v1439, %v1613
    %v1620 = vadd.f32 %v1442, %v1616
    %1621 = vrot.lane.b32.xlu0 %v1097, 104
    %v1622 = vpop.permute.xlu0 %1621
    %1623 = vrot.lane.b32.xlu0 %v1098, 104
    %v1624 = vpop.permute.xlu0 %1623
    %v1626 = vsel %vm212, %v1622, 0
    %v1629 = vsel %vm212, %v1624, 0
    %1631 = vmatprep.subr.bf16.mxu0 0
    %1632 = vmatpush1.bf16.xpose.msra.mxu0 %v1629
    %1633 = vmatprep.subr.bf16.mxu0 0
    %1634 = vmatpush1.bf16.xpose.msra.mxu0 0
    %1635 = vmatprep.subr.bf16.mxu0 0
    %1636 = vmatpush1.bf16.xpose.msra.mxu0 0
    %1637 = vmatprep.subr.bf16.mxu0 0
    %1638 = vmatpush1.bf16.xpose.msra.mxu0 0
    %1639 = vmatprep.subr.bf16.mxu0 0
    %1640 = vmatpush1.bf16.xpose.msra.mxu0 0
    %1641 = vmatprep.subr.bf16.mxu0 0
    %1642 = vmatpush1.bf16.xpose.msra.mxu0 0
    %1643 = vmatprep.subr.bf16.mxu0 0
    %1644 = vmatpush1.bf16.xpose.msra.mxu0 0
    %1645 = vmatprep.subr.bf16.mxu0 0
    %1646 = vmatpush1.bf16.xpose.msra.mxu0 0
    %1647 = vmatprep.subr.bf16.mxu0 0
    %1648 = vmatpush1.bf16.xpose.msra.mxu0 0
    %1649 = vmatprep.subr.bf16.mxu0 0
    %1650 = vmatpush1.bf16.xpose.msra.mxu0 0
    %1651 = vmatprep.subr.bf16.mxu0 0
    %1652 = vmatpush1.bf16.xpose.msra.mxu0 0
    %1653 = vmatprep.subr.bf16.mxu0 0
    %1654 = vmatpush1.bf16.xpose.msra.mxu0 0
    %1655 = vmatprep.subr.bf16.mxu0 0
    %1656 = vmatpush1.bf16.xpose.msra.mxu0 0
    %1657 = vmatprep.subr.bf16.mxu0 0
    %1658 = vmatpush1.bf16.xpose.msra.mxu0 0
    %1659 = vmatprep.subr.bf16.mxu0 0
    %1660 = vmatpush1.bf16.xpose.msra.mxu0 0
    %1661 = vmatprep.subr.bf16.mxu0 0
    %1662 = vmatpush1.bf16.xpose.msra.mxu0 0
    %1663 = vmatprep.mubr.bf16.mxu0 0
    %1664 = vmatmul.mubr.bf16.gmra.mrb[0].mxu0 %v1626
    %v1665 = vpop.f32.mrb[0].mxu0
    %v1666 = vadd.f32 0.0, %v1665
    %v1667 = vpop.f32.mrb[0].mxu0
    %v1668 = vpop.f32.mrb[0].mxu0
    %v1669 = vadd.f32 0.0, %v1668
    %v1670 = vpop.f32.mrb[0].mxu0
    %1671 = vdwg.mxu0
    %v1672 = vmul.f32 %v1666, 0.35355338
    %v1673 = vmul.f32 %v1669, 0.35355338
    %v1674 = vadd.f32 %v1672, %v1095
    %v1675 = vadd.f32 %v1673, %v1096
    %v1676 = vsel %vm264, %v1674, -inf
    %1677 = vmax.xlane.f32.xlu0 %v1676
    %v1678 = vpop.xlane.xlu0 %1677
    %v1679 = vsel %vm264, %v1675, -inf
    %1680 = vmax.xlane.f32.xlu0 %v1679
    %v1681 = vpop.xlane.xlu0 %1680
    %v1682 = vsub.f32 %v1674, %v1678
    %v1683 = vsub.f32 %v1675, %v1681
    %v1684 = vmul.f32 %v1682, 1.442695
    %v1685 = vpow.pop %v1684
    %v1686 = vmul.f32 %v1683, 1.442695
    %v1687 = vpow.pop %v1686
    %v1688 = vsel %vm264, %v1685, 0.0
    %1689 = vadd.xlane.f32.xlu0 %v1688
    %v1690 = vpop.xlane.xlu0 %1689
    %v1691 = vsel %vm264, %v1687, 0.0
    %1692 = vadd.xlane.f32.xlu0 %v1691
    %v1693 = vpop.xlane.xlu0 %1692
    %v1694 = vrcp.pop %v1690
    %v1695 = vrcp.pop %v1693
    %v1696 = vmul.f32 %v1685, %v1694
    %v1697 = vmul.f32 %v1687, %v1695
    %v1698 = vpack.c.bf16 %v1697, %v1696
    %1699 = vrot.lane.b32.xlu0 %v1098, 72
    %v1700 = vpop.permute.xlu0 %1699
    %v1703 = vsel %vm264, %v1698, 0
    %1705 = vmatprep.subr.bf16.mxu0 0
    %1706 = vmatpush1.bf16.msra.mxu0 %v1700
    %1707 = vmatprep.subr.bf16.mxu0 0
    %1708 = vmatpush1.bf16.msra.mxu0 0
    %1709 = vmatprep.subr.bf16.mxu0 0
    %1710 = vmatpush1.bf16.msra.mxu0 0
    %1711 = vmatprep.subr.bf16.mxu0 0
    %1712 = vmatpush1.bf16.msra.mxu0 0
    %1713 = vmatprep.subr.bf16.mxu0 0
    %1714 = vmatpush1.bf16.msra.mxu0 0
    %1715 = vmatprep.subr.bf16.mxu0 0
    %1716 = vmatpush1.bf16.msra.mxu0 0
    %1717 = vmatprep.subr.bf16.mxu0 0
    %1718 = vmatpush1.bf16.msra.mxu0 0
    %1719 = vmatprep.subr.bf16.mxu0 0
    %1720 = vmatpush1.bf16.msra.mxu0 0
    %1721 = vmatprep.subr.bf16.mxu0 0
    %1722 = vmatpush1.bf16.msra.mxu0 0
    %1723 = vmatprep.subr.bf16.mxu0 0
    %1724 = vmatpush1.bf16.msra.mxu0 0
    %1725 = vmatprep.subr.bf16.mxu0 0
    %1726 = vmatpush1.bf16.msra.mxu0 0
    %1727 = vmatprep.subr.bf16.mxu0 0
    %1728 = vmatpush1.bf16.msra.mxu0 0
    %1729 = vmatprep.subr.bf16.mxu0 0
    %1730 = vmatpush1.bf16.msra.mxu0 0
    %1731 = vmatprep.subr.bf16.mxu0 0
    %1732 = vmatpush1.bf16.msra.mxu0 0
    %1733 = vmatprep.subr.bf16.mxu0 0
    %1734 = vmatpush1.bf16.msra.mxu0 0
    %1735 = vmatprep.subr.bf16.mxu0 0
    %1736 = vmatpush1.bf16.msra.mxu0 0
    %1737 = vmatprep.mubr.bf16.mxu0 0
    %1738 = vmatmul.mubr.bf16.gmra.mrb[0].mxu0 %v1703
    %v1739 = vpop.f32.mrb[0].mxu0
    %v1740 = vadd.f32 0.0, %v1739
    %v1741 = vpop.f32.mrb[0].mxu0
    %v1742 = vpop.f32.mrb[0].mxu0
    %v1743 = vadd.f32 0.0, %v1742
    %v1744 = vpop.f32.mrb[0].mxu0
    %1745 = vdwg.mxu0
    %v1746 = vpack.c.bf16 %v1743, %v1740
    %v1747 = vld [vmem:[#allocation10 + $0x5c] sm:$0xf]
    %v1749 = vsel %vm212, %v1746, 0
    %v1752 = vsel %vm467, %v1747, 0
    %1754 = vmatprep.subr.bf16.mxu0 0
    %1755 = vmatpush1.bf16.msra.mxu0 %v1752
    %1756 = vmatprep.subr.bf16.mxu0 0
    %1757 = vmatpush1.bf16.msra.mxu0 0
    %1758 = vmatprep.subr.bf16.mxu0 0
    %1759 = vmatpush1.bf16.msra.mxu0 0
    %1760 = vmatprep.subr.bf16.mxu0 0
    %1761 = vmatpush1.bf16.msra.mxu0 0
    %1762 = vmatprep.subr.bf16.mxu0 0
    %1763 = vmatpush1.bf16.msra.mxu0 0
    %1764 = vmatprep.subr.bf16.mxu0 0
    %1765 = vmatpush1.bf16.msra.mxu0 0
    %1766 = vmatprep.subr.bf16.mxu0 0
    %1767 = vmatpush1.bf16.msra.mxu0 0
    %1768 = vmatprep.subr.bf16.mxu0 0
    %1769 = vmatpush1.bf16.msra.mxu0 0
    %1770 = vmatprep.subr.bf16.mxu0 0
    %1771 = vmatpush1.bf16.msra.mxu0 0
    %1772 = vmatprep.subr.bf16.mxu0 0
    %1773 = vmatpush1.bf16.msra.mxu0 0
    %1774 = vmatprep.subr.bf16.mxu0 0
    %1775 = vmatpush1.bf16.msra.mxu0 0
    %1776 = vmatprep.subr.bf16.mxu0 0
    %1777 = vmatpush1.bf16.msra.mxu0 0
    %1778 = vmatprep.subr.bf16.mxu0 0
    %1779 = vmatpush1.bf16.msra.mxu0 0
    %1780 = vmatprep.subr.bf16.mxu0 0
    %1781 = vmatpush1.bf16.msra.mxu0 0
    %1782 = vmatprep.subr.bf16.mxu0 0
    %1783 = vmatpush1.bf16.msra.mxu0 0
    %1784 = vmatprep.subr.bf16.mxu0 0
    %1785 = vmatpush1.bf16.msra.mxu0 0
    %1786 = vmatprep.mubr.bf16.mxu0 0
    %1787 = vmatmul.mubr.bf16.gmra.mrb[0].mxu0 %v1749
    %v1788 = vpop.f32.mrb[0].mxu0
    %v1789 = vadd.f32 0.0, %v1788
    %v1790 = vpop.f32.mrb[0].mxu0
    %v1791 = vpop.f32.mrb[0].mxu0
    %v1792 = vadd.f32 0.0, %v1791
    %v1793 = vpop.f32.mrb[0].mxu0
    %1794 = vdwg.mxu0
    %v1795 = vadd.f32 %v1619, %v1789
    %v1796 = vadd.f32 %v1620, %v1792
    %v1797 = vld [vmem:[#allocation10 + $0x60] sm:$0x1]
    %v1798 = vunpack.c.l.bf16 %v1797
    %v1799 = vlaneseq
    %v1800 = vshrl.u32 %v1799, 7
    %v1801 = vsub.s32 0, %v1800
    %v1802 = vrot.slane %v1798, %v1801
    %v1803 = vadd.f32 %v1795, %v1802
    %v1804 = vadd.f32 %v1796, %v1802
    %v1805 = vadd.f32 %v919, %v1803
    %v1806 = vadd.f32 %v920, %v1804
    %v1807 = vsel %vm97, %v1805, 0.0
    %1808 = vadd.xlane.f32.xlu0 %v1807
    %v1809 = vpop.xlane.xlu0 %1808
    %v1810 = vsel %vm97, %v1806, 0.0
    %1811 = vadd.xlane.f32.xlu0 %v1810
    %v1812 = vpop.xlane.xlu0 %1811
    %v1813 = vmul.f32 %v1809, %v104
    %v1814 = vmul.f32 %v1812, %v104
    %v1815 = vsub.f32 %v1805, %v1813
    %v1816 = vsub.f32 %v1806, %v1814
    %v1817 = vmul.f32 %v1815, %v1815
    %v1818 = vmul.f32 %v1816, %v1816
    %v1819 = vsel %vm97, %v1817, 0.0
    %1820 = vadd.xlane.f32.xlu0 %v1819
    %v1821 = vpop.xlane.xlu0 %1820
    %v1822 = vsel %vm97, %v1818, 0.0
    %1823 = vadd.xlane.f32.xlu0 %v1822
    %v1824 = vpop.xlane.xlu0 %1823
    %v1825 = vmul.f32 %v1821, %v104
    %v1826 = vmul.f32 %v1824, %v104
    %v1827 = vadd.f32 %v1825, 1e-05
    %v1828 = vadd.f32 %v1826, 1e-05
    %v1829 = vrsqrt.pop %v1827
    %v1830 = vrsqrt.pop %v1828
    %v1831 = vmul.f32 %v1815, %v1829
    %v1832 = vmul.f32 %v1816, %v1830
    %v1833 = vld [vmem:[%s4 + $0x4] sm:$0x1]
    %v1834 = vlaneseq
    %v1835 = vshrl.u32 %v1834, 7
    %v1836 = vsub.s32 0, %v1835
    %v1837 = vrot.slane %v1833, %v1836
    %v1838 = vmul.f32 %v1831, %v1837
    %v1839 = vmul.f32 %v1832, %v1837
    %v1840 = vld [vmem:[%s4 + $0x5] sm:$0x1]
    %v1841 = vlaneseq
    %v1842 = vshrl.u32 %v1841, 7
    %v1843 = vsub.s32 0, %v1842
    %v1844 = vrot.slane %v1840, %v1843
    %v1845 = vadd.f32 %v1838, %v1844
    %v1846 = vadd.f32 %v1839, %v1844
    %v1847 = vld [vmem:[#allocation10 + $0x64] sm:$0xf]
    %v1848 = vld [vmem:[#allocation10 + $0x68] sm:$0xf]
    %v1849 = vld [vmem:[#allocation10 + $0x6c] sm:$0xf]
    %v1850 = vld [vmem:[#allocation10 + $0x70] sm:$0xf]
    %v1851 = vld [vmem:[#allocation10 + $0x74] sm:$0x1]
    %v1852 = vpack.c.bf16 %v1846, %v1845
    %v1853 = vunpack.c.l.bf16 %v1851
    %v1854 = vlaneseq
    %v1855 = vshrl.u32 %v1854, 7
    %v1856 = vsub.s32 0, %v1855
    %v1857 = vrot.slane %v1853, %v1856
    %v1862 = vunpack.c.l.b16 %v1847
    %v1863 = vunpack.c.l.b16 %v1848
    %v1864 = vunpack.c.l.b16 %v1849
    %v1865 = vunpack.c.l.b16 %v1850
    %v1866 = vpack.c.b16 %v1863, %v1862
    %v1867 = vpack.c.b16 %v1865, %v1864
    %v1871 = vsel %vm97, %v1852, 0
    %1873 = vmatprep.subr.bf16.mxu0 0
    %1874 = vmatpush1.bf16.msra.mxu0 %v1866
    %1875 = vmatprep.subr.bf16.mxu0 0
    %1876 = vmatpush1.bf16.msra.mxu0 %v1867
    %1877 = vmatprep.subr.bf16.mxu0 0
    %1878 = vmatpush1.bf16.msra.mxu0 0
    %1879 = vmatprep.subr.bf16.mxu0 0
    %1880 = vmatpush1.bf16.msra.mxu0 0
    %1881 = vmatprep.subr.bf16.mxu0 0
    %1882 = vmatpush1.bf16.msra.mxu0 0
    %1883 = vmatprep.subr.bf16.mxu0 0
    %1884 = vmatpush1.bf16.msra.mxu0 0
    %1885 = vmatprep.subr.bf16.mxu0 0
    %1886 = vmatpush1.bf16.msra.mxu0 0
    %1887 = vmatprep.subr.bf16.mxu0 0
    %1888 = vmatpush1.bf16.msra.mxu0 0
    %1889 = vmatprep.subr.bf16.mxu0 0
    %1890 = vmatpush1.bf16.msra.mxu0 0
    %1891 = vmatprep.subr.bf16.mxu0 0
    %1892 = vmatpush1.bf16.msra.mxu0 0
    %1893 = vmatprep.subr.bf16.mxu0 0
    %1894 = vmatpush1.bf16.msra.mxu0 0
    %1895 = vmatprep.subr.bf16.mxu0 0
    %1896 = vmatpush1.bf16.msra.mxu0 0
    %1897 = vmatprep.subr.bf16.mxu0 0
    %1898 = vmatpush1.bf16.msra.mxu0 0
    %1899 = vmatprep.subr.bf16.mxu0 0
    %1900 = vmatpush1.bf16.msra.mxu0 0
    %1901 = vmatprep.subr.bf16.mxu0 0
    %1902 = vmatpush1.bf16.msra.mxu0 0
    %1903 = vmatprep.subr.bf16.mxu0 0
    %1904 = vmatpush1.bf16.msra.mxu0 0
    %1905 = vmatprep.mubr.bf16.mxu0 0
    %1906 = vmatmul.mubr.bf16.gmra.mrb[0].mxu0 %v1871
    %v1907 = vpop.f32.mrb[0].mxu0
    %v1908 = vadd.f32 %v1857, %v1907
    %v1909 = vpop.f32.mrb[0].mxu0
    %v1910 = vpop.f32.mrb[0].mxu0
    %v1911 = vadd.f32 %v1857, %v1910
    %v1912 = vpop.f32.mrb[0].mxu0
    %1913 = vdwg.mxu0
    %v1914 = vmax.f32 %v1908, 0.0
    %v1915 = vmax.f32 %v1911, 0.0
    %v1916 = vld [vmem:[#allocation10 + $0x78] sm:$0xf]
    %v1917 = vld [vmem:[#allocation10 + $0x7c] sm:$0xf]
    %v1918 = vld [vmem:[#allocation10 + $0x80] sm:$0xf]
    %v1919 = vld [vmem:[#allocation10 + $0x84] sm:$0xf]
    %v1920 = vld [vmem:[#allocation10 + $0x88] sm:$0xf]
    %v1921 = vld [vmem:[#allocation10 + $0x8c] sm:$0xf]
    %v1922 = vld [vmem:[#allocation10 + $0x90] sm:$0xf]
    %v1923 = vld [vmem:[#allocation10 + $0x94] sm:$0xf]
    %v1924 = vld [vmem:[#allocation10 + $0x98] sm:$0xf]
    %v1925 = vld [vmem:[#allocation10 + $0x9c] sm:$0xf]
    %v1926 = vld [vmem:[#allocation10 + $0xa0] sm:$0xf]
    %v1927 = vld [vmem:[#allocation10 + $0xa4] sm:$0xf]
    %v1928 = vld [vmem:[#allocation10 + $0xa8] sm:$0xf]
    %v1929 = vld [vmem:[#allocation10 + $0xac] sm:$0xf]
    %v1930 = vld [vmem:[#allocation10 + $0xb0] sm:$0xf]
    %v1931 = vld [vmem:[#allocation10 + $0xb4] sm:$0xf]
    %v1932 = vld [vmem:[#allocation10 + $0xb8] sm:$0x1]
    %v1933 = vpack.c.bf16 %v1915, %v1914
    %v1934 = vunpack.c.l.bf16 %v1932
    %v1935 = vlaneseq
    %v1936 = vshrl.u32 %v1935, 7
    %v1937 = vsub.s32 0, %v1936
    %v1938 = vrot.slane %v1934, %v1937
    %v1955 = vunpack.c.l.b16 %v1916
    %v1956 = vunpack.c.l.b16 %v1917
    %v1957 = vunpack.c.l.b16 %v1918
    %v1958 = vunpack.c.l.b16 %v1919
    %v1959 = vunpack.c.l.b16 %v1920
    %v1960 = vunpack.c.l.b16 %v1921
    %v1961 = vunpack.c.l.b16 %v1922
    %v1962 = vunpack.c.l.b16 %v1923
    %v1963 = vunpack.c.l.b16 %v1924
    %v1964 = vunpack.c.l.b16 %v1925
    %v1965 = vunpack.c.l.b16 %v1926
    %v1966 = vunpack.c.l.b16 %v1927
    %v1967 = vunpack.c.l.b16 %v1928
    %v1968 = vunpack.c.l.b16 %v1929
    %v1969 = vunpack.c.l.b16 %v1930
    %v1970 = vunpack.c.l.b16 %v1931
    %v1971 = vpack.c.b16 %v1956, %v1955
    %v1972 = vpack.c.b16 %v1958, %v1957
    %v1973 = vpack.c.b16 %v1960, %v1959
    %v1974 = vpack.c.b16 %v1962, %v1961
    %v1975 = vpack.c.b16 %v1964, %v1963
    %v1976 = vpack.c.b16 %v1966, %v1965
    %v1977 = vpack.c.b16 %v1968, %v1967
    %v1978 = vpack.c.b16 %v1970, %v1969
    %1987 = vmatprep.subr.bf16.mxu0 0
    %1988 = vmatpush1.bf16.msra.mxu0 %v1971
    %1989 = vmatprep.subr.bf16.mxu0 0
    %1990 = vmatpush1.bf16.msra.mxu0 %v1972
    %1991 = vmatprep.subr.bf16.mxu0 0
    %1992 = vmatpush1.bf16.msra.mxu0 %v1973
    %1993 = vmatprep.subr.bf16.mxu0 0
    %1994 = vmatpush1.bf16.msra.mxu0 %v1974
    %1995 = vmatprep.subr.bf16.mxu0 0
    %1996 = vmatpush1.bf16.msra.mxu0 %v1975
    %1997 = vmatprep.subr.bf16.mxu0 0
    %1998 = vmatpush1.bf16.msra.mxu0 %v1976
    %1999 = vmatprep.subr.bf16.mxu0 0
    %2000 = vmatpush1.bf16.msra.mxu0 %v1977
    %2001 = vmatprep.subr.bf16.mxu0 0
    %2002 = vmatpush1.bf16.msra.mxu0 %v1978
    %2003 = vmatprep.subr.bf16.mxu0 0
    %2004 = vmatpush1.bf16.msra.mxu0 0
    %2005 = vmatprep.subr.bf16.mxu0 0
    %2006 = vmatpush1.bf16.msra.mxu0 0
    %2007 = vmatprep.subr.bf16.mxu0 0
    %2008 = vmatpush1.bf16.msra.mxu0 0
    %2009 = vmatprep.subr.bf16.mxu0 0
    %2010 = vmatpush1.bf16.msra.mxu0 0
    %2011 = vmatprep.subr.bf16.mxu0 0
    %2012 = vmatpush1.bf16.msra.mxu0 0
    %2013 = vmatprep.subr.bf16.mxu0 0
    %2014 = vmatpush1.bf16.msra.mxu0 0
    %2015 = vmatprep.subr.bf16.mxu0 0
    %2016 = vmatpush1.bf16.msra.mxu0 0
    %2017 = vmatprep.subr.bf16.mxu0 0
    %2018 = vmatpush1.bf16.msra.mxu0 0
    %2019 = vmatprep.mubr.bf16.mxu0 0
    %2020 = vmatmul.mubr.bf16.gmra.mrb[0].mxu0 %v1933
    %v2021 = vpop.f32.mrb[0].mxu0
    %v2022 = vadd.f32 %v1938, %v2021
    %v2023 = vpop.f32.mrb[0].mxu0
    %v2024 = vpop.f32.mrb[0].mxu0
    %v2025 = vadd.f32 %v1938, %v2024
    %v2026 = vpop.f32.mrb[0].mxu0
    %2027 = vdwg.mxu0
    %v2028 = vadd.f32 %v1805, %v2022
    %v2029 = vadd.f32 %v1806, %v2025
    %2030 = vst.msk [vmem:[#allocation11] sm:$0xff] %vm97, %v2028
    %2031 = vst.msk [vmem:[#allocation11 + $0x8] sm:$0xff] %vm97, %v2029
    // Predicated region
    $region46: #{tpu_custom_call.1} parent=1 // pred_check
      _
    $region47: #{tpu_custom_call.1} parent=1 // pred_check_branch
      %2033 = sbr.rel (0) target = $region49
    $region48: #{tpu_custom_call.1} parent=1 // pred_region
      %s2035 = ssub.s32 256, 256
      %2036 = vsyncadd [#allocation4], %s2035
      %s2037 = sshll.u32 [#allocation11], 4
      %s2038 = int_to_ptr.vmem [resolvable:$true] %s2037
      %2043 = dma.vmem_to_hbm [thread:$0]  %s2038, 256, %s6, [#allocation4], 128, 128, 8
    $region49: #{tpu_custom_call.1} parent=1 // pred_fallthru
      _
    // Predicated region
    $region50: #{tpu_custom_call.1} parent=1 // pred_check
      _
    $region51: #{tpu_custom_call.1} parent=1 // pred_check_branch
      %2045 = sbr.rel (0) target = $region53
    $region52: #{tpu_custom_call.1} parent=1 // pred_region
      %2046 = dma.done [#allocation4], 256
    $region53: #{tpu_custom_call.1} parent=1 // pred_fallthru
      _
    %2047 = vsyncpa [#allocation3], 1
    %2048 = vsyncpa [#allocation6], 1
    %2049 = vsyncpa [#allocation9], 1
    %2050 = vsyncpa [#allocation4], 1

</llo_original>
